<compile_context>
chip_gen: v7x
topology: tpu7x:2x2x1
jax: 0.10.0
libtpu: 0.0.40
codegen_flags: <defaults>
</compile_context>

<pallas_src>
import jax
import jax.numpy as jnp
from jax import lax
from jax.experimental import pallas as pl
from jax.experimental.pallas import tpu as pltpu

# ------------------- fixed hyper-parameters -------------------
B, T, F = 2, 8, 4              # batch, input_time_steps, num_of_input_features
OUT_FEATS = 3                  # num_of_output_features
H = 32                         # lstm hidden size
NUM_DIR = 2                    # bidirectional, num_layers = 1
FC_HID = 64                    # FC units
LN_EPS0 = 1e-5                 # LayerNorm eps after LSTM block
LN_EPS1 = 1e-5                 # LayerNorm eps inside FC head
CONV_KH, CONV_KW = 2, 3        # conv kernel (kx, ky), stride 1, out_channels forced to 1
POOL_W, POOL_S = 2, 2          # MaxPool2d((1, 2), stride=2)
CONV_W_OUT = H - CONV_KW + 1                      # 30
POOL_W_OUT = (CONV_W_OUT - POOL_W) // POOL_S + 1  # 15
G8 = 8 * H                                        # combined (both-direction) gate width = 256
G6 = 6 * H                                        # i/f/o (sigmoid) lanes = 192
H2 = NUM_DIR * H                                  # 64

VMEM_SPEC = pl.BlockSpec(memory_space=pltpu.MemorySpace.VMEM)

# ---- lane offsets inside the packed slabs (all 64-lane aligned) ----
# weight slab (2H, 384) bf16
WS_H1 = 0        # conn-Linear folded into FC1 (lstm path)      cols   0: 64
WS_H2 = 64       # FC1 cnn-path rows, padded to 64 rows         cols  64:128
WS_CP = 128      # conv+pool fold, [even | odd] 64-lane halves  cols 128:256
WS_FC2 = 256     # final Linear(64 -> 3)                        cols 256:259
# bias / LayerNorm slab (1, 512) f32
BS_LN0G, BS_LN0B = 0, 64
BS_BH, BS_LN1G = 128, 192
BS_LN1B, BS_BCP = 256, 320
BS_FC2B = 384


# ------------------- the single fused kernel -------------------
def fused_kernel(x_ref, wx_ref, whh_ref, wsl_ref, bsl_ref, o_ref):
    # Constant per-lane affine turning one full-width tanh into sigmoid on the i/f/o lanes and
    # plain tanh on the g lanes: sigmoid(z) = 0.5*tanh(z/2)+0.5 (the /2 is folded into the weights).
    lane = lax.broadcasted_iota(jnp.int32, (1, G8), 1)
    a_scale = jnp.where(lane < G6, 0.5, 1.0)
    a_shift = jnp.where(lane < G6, 0.5, 0.0)

    # ---------- bidirectional LSTM ----------
    # Hoisted input projection for ALL time steps and BOTH directions.  Biases are folded in via
    # the constant-1 column appended to x; backward-direction time reversal is baked into wx.
    # Gate column order per 8H block: [i_f|i_b | f_f|f_b | o_f|o_b | g_f|g_b], each H wide.
    xproj = jnp.dot(x_ref[...], wx_ref[...], preferred_element_type=jnp.float32)   # (B, T*8H) f32
    whh = whh_ref[...]                                                             # (2H, 8H) bf16

    # step 0: h = c = 0 -> recurrent matmul and f*c term vanish.
    a = jnp.tanh(xproj[:, 0:G8]) * a_scale + a_shift
    c = a[:, 0:2 * H] * a[:, G6:G8]
    h = a[:, 4 * H:G6] * jnp.tanh(c)
    # steps 1..T-1, fully unrolled: one 256-lane bf16 MXU push + one full-width tanh per step.
    for t in range(1, T):
        g = (jnp.dot(h.astype(jnp.bfloat16), whh, preferred_element_type=jnp.float32)
             + xproj[:, t * G8:(t + 1) * G8])                   # lane-aligned 256-wide slice
        a = jnp.tanh(g) * a_scale + a_shift                     # all 4 gates, both directions
        c = a[:, 2 * H:4 * H] * c + a[:, 0:2 * H] * a[:, G6:G8]
        h = a[:, 4 * H:G6] * jnp.tanh(c)
    # h == torch h_n.permute(1, 0, 2).reshape(B, 2H) == [h_forward | h_backward]

    # ---------- ReLU -> Dropout(id) -> LayerNorm((2,H)) -> Skip(id) ----------
    xl = jnp.maximum(h, 0.0)
    mu = jnp.mean(xl, axis=-1, keepdims=True)
    va = jnp.mean((xl - mu) ** 2, axis=-1, keepdims=True)
    xl = ((xl - mu) * lax.rsqrt(va + LN_EPS0) * bsl_ref[:, BS_LN0G:BS_LN0G + H2]
          + bsl_ref[:, BS_LN0B:BS_LN0B + H2])
    xb = xl.astype(jnp.bfloat16)

    # ---------- CNN: Conv2d(1->1,(2,3)) + MaxPool2d((1,2),2) + bias + ReLU (one matmul) ----------
    cp = jnp.dot(xb, wsl_ref[:, WS_CP:WS_CP + 2 * H2], preferred_element_type=jnp.float32)  # (B,128)
    cnn = jnp.maximum(jnp.maximum(cp[:, 0:H2], cp[:, H2:2 * H2])
                      + bsl_ref[:, BS_BCP:BS_BCP + H2], 0.0)     # (B, 64); lanes 15:64 stay 0

    # ---------- connection Linear folded into FC1, then FC head ----------
    hh = (jnp.dot(xb, wsl_ref[:, WS_H1:WS_H1 + H2], preferred_element_type=jnp.float32)
          + jnp.dot(cnn.astype(jnp.bfloat16), wsl_ref[:, WS_H2:WS_H2 + H2],
                    preferred_element_type=jnp.float32)
          + bsl_ref[:, BS_BH:BS_BH + FC_HID])
    hh = jnp.maximum(hh, 0.0)                                    # ReLU (Dropout identity in eval)
    m2 = jnp.mean(hh, axis=-1, keepdims=True)
    v2 = jnp.mean((hh - m2) ** 2, axis=-1, keepdims=True)
    hh = ((hh - m2) * lax.rsqrt(v2 + LN_EPS1) * bsl_ref[:, BS_LN1G:BS_LN1G + FC_HID]
          + bsl_ref[:, BS_LN1B:BS_LN1B + FC_HID])
    o_ref[...] = (jnp.dot(hh.astype(jnp.bfloat16), wsl_ref[:, WS_FC2:WS_FC2 + OUT_FEATS],
                          preferred_element_type=jnp.float32)
                  + bsl_ref[:, BS_FC2B:BS_FC2B + OUT_FEATS])


def lstm_cnn_forward(x, kp):
    # x: (B, T, F) batch-first, same as the PyTorch module.  Wrapper ops: row-major flatten,
    # append the constant-1 column that drives the folded biases, cast to bf16.
    x_flat = x.reshape(B, T * F)
    x_aug = jnp.concatenate([x_flat, jnp.ones((B, 1), x_flat.dtype)], axis=1).astype(jnp.bfloat16)
    out = pl.pallas_call(
        fused_kernel,
        out_shape=jax.ShapeDtypeStruct((B, OUT_FEATS), jnp.float32),
        in_specs=[VMEM_SPEC] * 5,
        out_specs=VMEM_SPEC,
    )(x_aug, kp["wx"], kp["whh"], kp["wsl"], kp["bsl"])
    return out[:, None, :]                                       # torch.unsqueeze(x, 1) -> (B, 1, 3)
    # TODO(synk): Dropout layers are identity (eval mode); training-mode stochastic dropout not modeled.


# ------------------- parameters (deterministic, synthetic, PyTorch-layout) -------------------
def make_params(key):
    ks = jax.random.split(key, 24)
    r = lambda k, shape, s=0.1: (s * jax.random.normal(k, shape, jnp.float32))
    p = {}
    # LSTM (PyTorch gate order i,f,g,o), weights pre-transposed for x @ W
    p["wih_f_t"] = r(ks[0], (F, 4 * H))
    p["whh_f_t"] = r(ks[1], (H, 4 * H))
    p["b_f"] = r(ks[2], (1, 4 * H)) + r(ks[3], (1, 4 * H))        # b_ih + b_hh
    p["wih_b_t"] = r(ks[4], (F, 4 * H))
    p["whh_b_t"] = r(ks[5], (H, 4 * H))
    p["b_b"] = r(ks[6], (1, 4 * H)) + r(ks[7], (1, 4 * H))
    # LayerNorm after LSTM block (over (NUM_DIR, H), flattened)
    p["ln0_g"] = 1.0 + r(ks[8], (1, H2))
    p["ln0_b"] = r(ks[9], (1, H2))
    # Conv2d(1 -> 1, (2,3), stride 1)
    p["conv_w"] = r(ks[10], (CONV_KH, CONV_KW), 0.3)
    p["conv_b"] = r(ks[11], (1,), 0.3)
    # connection Linear(64 -> 15)
    p["conn_w"] = r(ks[12], (H2, POOL_W_OUT))
    p["conn_b"] = r(ks[13], (1, POOL_W_OUT))
    # FC1 Linear(30 -> 64), split into [conn-part ; cnn-part] rows
    wfc1 = r(ks[14], (2 * POOL_W_OUT, FC_HID))
    p["fc1_wa"] = wfc1[:POOL_W_OUT]
    p["fc1_wb"] = wfc1[POOL_W_OUT:]
    p["fc1_b"] = r(ks[15], (1, FC_HID))
    # LayerNorm(64)
    p["ln1_g"] = 1.0 + r(ks[16], (1, FC_HID))
    p["ln1_b"] = r(ks[17], (1, FC_HID))
    # final Linear(64 -> OUT_FEATS)
    p["fc2_w"] = r(ks[18], (FC_HID, OUT_FEATS))
    p["fc2_b"] = r(ks[19], (1, OUT_FEATS))
    return p


# ------------------- one-time param folding / layout prep for the fused kernel -------------------
def prep_params(p):
    f32 = jnp.float32

    def gates(w):   # torch gate order along the last axis: i, f, g, o (each H wide)
        return w[:, 0:H], w[:, H:2 * H], w[:, 2 * H:3 * H], w[:, 3 * H:4 * H]

    # --- LSTM weights regrouped to combined per-step layout [i_f|i_b|f_f|f_b|o_f|o_b|g_f|g_b] ---
    i_f, f_f, g_f, o_f = gates(p["wih_f_t"])
    i_b, f_b, g_b, o_b = gates(p["wih_b_t"])
    zF = jnp.zeros((F, H), f32)
    wf8 = jnp.concatenate([i_f, zF, f_f, zF, o_f, zF, g_f, zF], axis=1)   # (F, 8H) forward slots
    wb8 = jnp.concatenate([zF, i_b, zF, f_b, zF, o_b, zF, g_b], axis=1)   # (F, 8H) backward slots

    hi_f, hf_f, hg_f, ho_f = gates(p["whh_f_t"])
    hi_b, hf_b, hg_b, ho_b = gates(p["whh_b_t"])
    zH = jnp.zeros((H, H), f32)
    whh_comb = jnp.concatenate([
        jnp.concatenate([hi_f, zH, hf_f, zH, ho_f, zH, hg_f, zH], axis=1),   # rows 0:H  <- h_fwd
        jnp.concatenate([zH, hi_b, zH, hf_b, zH, ho_b, zH, hg_b], axis=1),   # rows H:2H <- h_bwd
    ], axis=0)                                                               # (2H, 8H)

    bi_f, bf_f, bg_f, bo_f = gates(p["b_f"])
    bi_b, bf_b, bg_b, bo_b = gates(p["b_b"])
    b_comb = jnp.concatenate([bi_f, bi_b, bf_f, bf_b, bo_f, bo_b, bg_f, bg_b], axis=1)  # (1, 8H)

    # --- sigmoid-as-tanh: pre-scale i/f/o columns by 0.5 so the kernel runs ONE tanh per step ---
    s8 = jnp.concatenate([jnp.full((1, G6), 0.5, f32), jnp.ones((1, 2 * H), f32)], axis=1)
    wf8, wb8 = wf8 * s8, wb8 * s8
    whh_comb = whh_comb * s8
    b_comb = b_comb * s8

    # --- big x-projection weight: baked time reversal for the backward direction; bias folded in
    #     as an extra row driven by the constant-1 column appended to x ---
    wx_big = jnp.zeros((T * F, T * G8), f32)
    for t in range(T):
        wx_big = wx_big.at[t * F:(t + 1) * F, t * G8:(t + 1) * G8].add(wf8)
        wx_big = wx_big.at[(T - 1 - t) * F:(T - t) * F, t * G8:(t + 1) * G8].add(wb8)
    wx_aug = jnp.concatenate([wx_big, jnp.tile(b_comb, (1, T))], axis=0)     # (T*F+1, T*8H)

    # --- Conv2d(1->1,(2,3)) + MaxPool2d((1,2),2) folded into one (2H, 128) matrix:
    #     cols 0:15 = even pool candidates, cols 64:79 = odd candidates, rest zero ---
    rows = jnp.arange(H2)[:, None]
    cols = jnp.arange(CONV_W_OUT)[None, :]
    M = jnp.zeros((H2, CONV_W_OUT), f32)
    for kh in range(CONV_KH):
        for kw in range(CONV_KW):
            M = M + jnp.where(rows == kh * H + cols + kw, p["conv_w"][kh, kw], 0.0)
    pcols = jnp.arange(POOL_W_OUT)[None, :]
    crows = jnp.arange(CONV_W_OUT)[:, None]
    even = M @ (crows == POOL_S * pcols).astype(f32)         # (2H, 15)
    odd = M @ (crows == POOL_S * pcols + 1).astype(f32)      # (2H, 15)
    zp = jnp.zeros((H2, H2 - POOL_W_OUT), f32)
    w_cp2 = jnp.concatenate([even, zp, odd, zp], axis=1)     # (2H, 128)

    # --- connection Linear folded into FC1 ---
    w_h1 = p["conn_w"] @ p["fc1_wa"]                         # (2H, FC_HID)
    b_h = p["conn_b"] @ p["fc1_wa"] + p["fc1_b"]             # (1, FC_HID)
    w_h2 = jnp.concatenate([p["fc1_wb"],
                            jnp.zeros((H2 - POOL_W_OUT, FC_HID), f32)], axis=0)   # (64, 64)
    fc2 = jnp.concatenate([p["fc2_w"],
                           jnp.zeros((FC_HID, H2 - OUT_FEATS), f32)], axis=1)     # (64, 64)

    # --- lane-aligned slabs: one bf16 weight slab + one f32 bias/LayerNorm slab ---
    w_slab = jnp.concatenate([w_h1, w_h2, w_cp2, fc2,
                              jnp.zeros((H2, 384 - 320), f32)], axis=1)           # (64, 384)

    def pad64(v):
        return jnp.concatenate([v, jnp.zeros((1, H2 - v.shape[1]), f32)], axis=1)
    b_cp = jnp.full((1, POOL_W_OUT), p["conv_b"][0], f32)
    b_slab = jnp.concatenate([p["ln0_g"], p["ln0_b"], b_h, p["ln1_g"], p["ln1_b"],
                              pad64(b_cp), pad64(p["fc2_b"]),
                              jnp.zeros((1, H2), f32)], axis=1)                   # (1, 512)

    return dict(wx=wx_aug.astype(jnp.bfloat16),
                whh=whh_comb.astype(jnp.bfloat16),
                wsl=w_slab.astype(jnp.bfloat16),
                bsl=b_slab)


# ------------------- pure-JAX unfolded f32 reference (mirrors the PyTorch forward) -------------------
def torch_style_reference(x, p):
    def cell(xt, h, c, wih, whh, b):
        g = xt @ wih + h @ whh + b
        i = jax.nn.sigmoid(g[:, 0:H]); f = jax.nn.sigmoid(g[:, H:2 * H])
        gg = jnp.tanh(g[:, 2 * H:3 * H]); o = jax.nn.sigmoid(g[:, 3 * H:4 * H])
        c = f * c + i * gg
        return o * jnp.tanh(c), c

    z = jnp.zeros((B, H), jnp.float32)
    hf, cf, hb, cb = z, z, z, z
    for t in range(T):
        hf, cf = cell(x[:, t], hf, cf, p["wih_f_t"], p["whh_f_t"], p["b_f"])
        hb, cb = cell(x[:, T - 1 - t], hb, cb, p["wih_b_t"], p["whh_b_t"], p["b_b"])
    xp = jnp.concatenate([hf, hb], axis=-1)               # h_n.permute(1,0,2) flattened
    xp = jnp.maximum(xp, 0.0)
    mean = xp.mean(-1, keepdims=True); var = ((xp - mean) ** 2).mean(-1, keepdims=True)
    xp = (xp - mean) / jnp.sqrt(var + LN_EPS0) * p["ln0_g"] + p["ln0_b"]
    img = xp.reshape(B, NUM_DIR, H)
    conv = jnp.zeros((B, CONV_W_OUT), jnp.float32)
    for kh in range(CONV_KH):
        for kw in range(CONV_KW):
            conv = conv + img[:, kh, kw:kw + CONV_W_OUT] * p["conv_w"][kh, kw]
    conv = conv + p["conv_b"][0]
    cnn = jnp.maximum(jnp.maximum(conv[:, 0::2], conv[:, 1::2]), 0.0)
    conn = xp @ p["conn_w"] + p["conn_b"]
    fc_in = jnp.concatenate([conn, cnn], axis=-1)
    hh = fc_in @ jnp.concatenate([p["fc1_wa"], p["fc1_wb"]], axis=0) + p["fc1_b"]
    hh = jnp.maximum(hh, 0.0)
    m = hh.mean(-1, keepdims=True); v = ((hh - m) ** 2).mean(-1, keepdims=True)
    hh = (hh - m) / jnp.sqrt(v + LN_EPS1) * p["ln1_g"] + p["ln1_b"]
    out = hh @ p["fc2_w"] + p["fc2_b"]
    return out[:, None, :]


if __name__ == "__main__":
    key = jax.random.PRNGKey(0)
    k_param, k_x = jax.random.split(key)
    params = make_params(k_param)
    kparams = prep_params(params)
    x = jax.random.normal(k_x, (B, T, F), jnp.float32)

    y = jax.jit(lstm_cnn_forward)(x, kparams)
    jax.block_until_ready(y)
    assert y.shape == (B, 1, OUT_FEATS) and y.dtype == jnp.float32
    assert bool(jnp.all(jnp.isfinite(y)))

    # correctness vs the unfolded f32 reference (loose tolerance covers bf16 weight/activation
    # storage, MXU default-precision passes and the f32 associativity changes from the folds)
    y_ref = torch_style_reference(x, params)
    assert bool(jnp.allclose(y, y_ref, atol=5e-2, rtol=5e-2)), \
        f"max abs diff {float(jnp.max(jnp.abs(y - y_ref)))}"
    print("KERNEL_OK")
</pallas_src>

<mosaic_0001>
module attributes {stable_mosaic.version = 11 : i64} {
  func.func @fused_kernel(%arg0: memref<2x33xbf16, #tpu.memory_space<vmem>>, %arg1: memref<33x2048xbf16, #tpu.memory_space<vmem>>, %arg2: memref<64x256xbf16, #tpu.memory_space<vmem>>, %arg3: memref<64x384xbf16, #tpu.memory_space<vmem>>, %arg4: memref<1x512xf32, #tpu.memory_space<vmem>>, %arg5: memref<2x3xf32, #tpu.memory_space<vmem>>) attributes {dimension_semantics = [], scalar_prefetch = 0 : i64, scratch_operands = 0 : i64, tpu.core_type = #tpu.core_type<tc>} {
    %0 = tpu.iota {dimensions = array<i32: 1>} : vector<1x256xi32>
    %c192_i32 = arith.constant 192 : i32
    %1 = vector.broadcast %c192_i32 : i32 to vector<1x256xi32>
    %2 = arith.cmpi slt, %0, %1 : vector<1x256xi32>
    %cst = arith.constant 5.000000e-01 : f32
    %cst_0 = arith.constant 1.000000e+00 : f32
    %3 = vector.broadcast %cst : f32 to vector<1x256xf32>
    %4 = vector.broadcast %cst_0 : f32 to vector<1x256xf32>
    %5 = arith.select %2, %3, %4 : vector<1x256xi1>, vector<1x256xf32>
    %c192_i32_1 = arith.constant 192 : i32
    %6 = vector.broadcast %c192_i32_1 : i32 to vector<1x256xi32>
    %7 = arith.cmpi slt, %0, %6 : vector<1x256xi32>
    %cst_2 = arith.constant 5.000000e-01 : f32
    %cst_3 = arith.constant 0.000000e+00 : f32
    %8 = vector.broadcast %cst_2 : f32 to vector<1x256xf32>
    %9 = vector.broadcast %cst_3 : f32 to vector<1x256xf32>
    %10 = arith.select %7, %8, %9 : vector<1x256xi1>, vector<1x256xf32>
    %c0 = arith.constant 0 : index
    %c0_4 = arith.constant 0 : index
    %11 = vector.load %arg0[%c0, %c0_4] : memref<2x33xbf16, #tpu.memory_space<vmem>>, vector<2x33xbf16>
    %c0_5 = arith.constant 0 : index
    %c0_6 = arith.constant 0 : index
    %12 = vector.load %arg1[%c0_5, %c0_6] : memref<33x2048xbf16, #tpu.memory_space<vmem>>, vector<33x2048xbf16>
    %cst_7 = arith.constant dense<0.000000e+00> : vector<2x2048xf32>
    %13 = tpu.matmul %11, %12, %cst_7 {dimension_numbers = #tpu.dot_dimension_numbers<[1], [0], [0], [1], [0, 0, 1, 1], [], []>} : vector<2x33xbf16>, vector<33x2048xbf16>, vector<2x2048xf32> -> vector<2x2048xf32>
    %c0_8 = arith.constant 0 : index
    %c0_9 = arith.constant 0 : index
    %14 = vector.load %arg2[%c0_8, %c0_9] : memref<64x256xbf16, #tpu.memory_space<vmem>>, vector<64x256xbf16>
    %15 = vector.extract_strided_slice %13 {offsets = [0, 0], sizes = [2, 256], strides = [1, 1]} : vector<2x2048xf32> to vector<2x256xf32>
    %16 = math.tanh %15 : vector<2x256xf32>
    %17 = vector.broadcast %5 : vector<1x256xf32> to vector<2x256xf32>
    %18 = arith.mulf %16, %17 : vector<2x256xf32>
    %19 = vector.broadcast %10 : vector<1x256xf32> to vector<2x256xf32>
    %20 = arith.addf %18, %19 : vector<2x256xf32>
    %21 = vector.extract_strided_slice %20 {offsets = [0, 0], sizes = [2, 64], strides = [1, 1]} : vector<2x256xf32> to vector<2x64xf32>
    %22 = vector.extract_strided_slice %20 {offsets = [0, 192], sizes = [2, 64], strides = [1, 1]} : vector<2x256xf32> to vector<2x64xf32>
    %23 = arith.mulf %21, %22 : vector<2x64xf32>
    %24 = vector.extract_strided_slice %20 {offsets = [0, 128], sizes = [2, 64], strides = [1, 1]} : vector<2x256xf32> to vector<2x64xf32>
    %25 = math.tanh %23 : vector<2x64xf32>
    %26 = arith.mulf %24, %25 : vector<2x64xf32>
    %27 = arith.truncf %26 : vector<2x64xf32> to vector<2x64xbf16>
    %cst_10 = arith.constant dense<0.000000e+00> : vector<2x256xf32>
    %28 = tpu.matmul %27, %14, %cst_10 {dimension_numbers = #tpu.dot_dimension_numbers<[1], [0], [0], [1], [0, 0, 1, 1], [], []>} : vector<2x64xbf16>, vector<64x256xbf16>, vector<2x256xf32> -> vector<2x256xf32>
    %29 = vector.extract_strided_slice %13 {offsets = [0, 256], sizes = [2, 256], strides = [1, 1]} : vector<2x2048xf32> to vector<2x256xf32>
    %30 = arith.addf %28, %29 : vector<2x256xf32>
    %31 = math.tanh %30 : vector<2x256xf32>
    %32 = vector.broadcast %5 : vector<1x256xf32> to vector<2x256xf32>
    %33 = arith.mulf %31, %32 : vector<2x256xf32>
    %34 = vector.broadcast %10 : vector<1x256xf32> to vector<2x256xf32>
    %35 = arith.addf %33, %34 : vector<2x256xf32>
    %36 = vector.extract_strided_slice %35 {offsets = [0, 64], sizes = [2, 64], strides = [1, 1]} : vector<2x256xf32> to vector<2x64xf32>
    %37 = arith.mulf %36, %23 : vector<2x64xf32>
    %38 = vector.extract_strided_slice %35 {offsets = [0, 0], sizes = [2, 64], strides = [1, 1]} : vector<2x256xf32> to vector<2x64xf32>
    %39 = vector.extract_strided_slice %35 {offsets = [0, 192], sizes = [2, 64], strides = [1, 1]} : vector<2x256xf32> to vector<2x64xf32>
    %40 = arith.mulf %38, %39 : vector<2x64xf32>
    %41 = arith.addf %37, %40 : vector<2x64xf32>
    %42 = vector.extract_strided_slice %35 {offsets = [0, 128], sizes = [2, 64], strides = [1, 1]} : vector<2x256xf32> to vector<2x64xf32>
    %43 = math.tanh %41 : vector<2x64xf32>
    %44 = arith.mulf %42, %43 : vector<2x64xf32>
    %45 = arith.truncf %44 : vector<2x64xf32> to vector<2x64xbf16>
    %cst_11 = arith.constant dense<0.000000e+00> : vector<2x256xf32>
    %46 = tpu.matmul %45, %14, %cst_11 {dimension_numbers = #tpu.dot_dimension_numbers<[1], [0], [0], [1], [0, 0, 1, 1], [], []>} : vector<2x64xbf16>, vector<64x256xbf16>, vector<2x256xf32> -> vector<2x256xf32>
    %47 = vector.extract_strided_slice %13 {offsets = [0, 512], sizes = [2, 256], strides = [1, 1]} : vector<2x2048xf32> to vector<2x256xf32>
    %48 = arith.addf %46, %47 : vector<2x256xf32>
    %49 = math.tanh %48 : vector<2x256xf32>
    %50 = vector.broadcast %5 : vector<1x256xf32> to vector<2x256xf32>
    %51 = arith.mulf %49, %50 : vector<2x256xf32>
    %52 = vector.broadcast %10 : vector<1x256xf32> to vector<2x256xf32>
    %53 = arith.addf %51, %52 : vector<2x256xf32>
    %54 = vector.extract_strided_slice %53 {offsets = [0, 64], sizes = [2, 64], strides = [1, 1]} : vector<2x256xf32> to vector<2x64xf32>
    %55 = arith.mulf %54, %41 : vector<2x64xf32>
    %56 = vector.extract_strided_slice %53 {offsets = [0, 0], sizes = [2, 64], strides = [1, 1]} : vector<2x256xf32> to vector<2x64xf32>
    %57 = vector.extract_strided_slice %53 {offsets = [0, 192], sizes = [2, 64], strides = [1, 1]} : vector<2x256xf32> to vector<2x64xf32>
    %58 = arith.mulf %56, %57 : vector<2x64xf32>
    %59 = arith.addf %55, %58 : vector<2x64xf32>
    %60 = vector.extract_strided_slice %53 {offsets = [0, 128], sizes = [2, 64], strides = [1, 1]} : vector<2x256xf32> to vector<2x64xf32>
    %61 = math.tanh %59 : vector<2x64xf32>
    %62 = arith.mulf %60, %61 : vector<2x64xf32>
    %63 = arith.truncf %62 : vector<2x64xf32> to vector<2x64xbf16>
    %cst_12 = arith.constant dense<0.000000e+00> : vector<2x256xf32>
    %64 = tpu.matmul %63, %14, %cst_12 {dimension_numbers = #tpu.dot_dimension_numbers<[1], [0], [0], [1], [0, 0, 1, 1], [], []>} : vector<2x64xbf16>, vector<64x256xbf16>, vector<2x256xf32> -> vector<2x256xf32>
    %65 = vector.extract_strided_slice %13 {offsets = [0, 768], sizes = [2, 256], strides = [1, 1]} : vector<2x2048xf32> to vector<2x256xf32>
    %66 = arith.addf %64, %65 : vector<2x256xf32>
    %67 = math.tanh %66 : vector<2x256xf32>
    %68 = vector.broadcast %5 : vector<1x256xf32> to vector<2x256xf32>
    %69 = arith.mulf %67, %68 : vector<2x256xf32>
    %70 = vector.broadcast %10 : vector<1x256xf32> to vector<2x256xf32>
    %71 = arith.addf %69, %70 : vector<2x256xf32>
    %72 = vector.extract_strided_slice %71 {offsets = [0, 64], sizes = [2, 64], strides = [1, 1]} : vector<2x256xf32> to vector<2x64xf32>
    %73 = arith.mulf %72, %59 : vector<2x64xf32>
    %74 = vector.extract_strided_slice %71 {offsets = [0, 0], sizes = [2, 64], strides = [1, 1]} : vector<2x256xf32> to vector<2x64xf32>
    %75 = vector.extract_strided_slice %71 {offsets = [0, 192], sizes = [2, 64], strides = [1, 1]} : vector<2x256xf32> to vector<2x64xf32>
    %76 = arith.mulf %74, %75 : vector<2x64xf32>
    %77 = arith.addf %73, %76 : vector<2x64xf32>
    %78 = vector.extract_strided_slice %71 {offsets = [0, 128], sizes = [2, 64], strides = [1, 1]} : vector<2x256xf32> to vector<2x64xf32>
    %79 = math.tanh %77 : vector<2x64xf32>
    %80 = arith.mulf %78, %79 : vector<2x64xf32>
    %81 = arith.truncf %80 : vector<2x64xf32> to vector<2x64xbf16>
    %cst_13 = arith.constant dense<0.000000e+00> : vector<2x256xf32>
    %82 = tpu.matmul %81, %14, %cst_13 {dimension_numbers = #tpu.dot_dimension_numbers<[1], [0], [0], [1], [0, 0, 1, 1], [], []>} : vector<2x64xbf16>, vector<64x256xbf16>, vector<2x256xf32> -> vector<2x256xf32>
    %83 = vector.extract_strided_slice %13 {offsets = [0, 1024], sizes = [2, 256], strides = [1, 1]} : vector<2x2048xf32> to vector<2x256xf32>
    %84 = arith.addf %82, %83 : vector<2x256xf32>
    %85 = math.tanh %84 : vector<2x256xf32>
    %86 = vector.broadcast %5 : vector<1x256xf32> to vector<2x256xf32>
    %87 = arith.mulf %85, %86 : vector<2x256xf32>
    %88 = vector.broadcast %10 : vector<1x256xf32> to vector<2x256xf32>
    %89 = arith.addf %87, %88 : vector<2x256xf32>
    %90 = vector.extract_strided_slice %89 {offsets = [0, 64], sizes = [2, 64], strides = [1, 1]} : vector<2x256xf32> to vector<2x64xf32>
    %91 = arith.mulf %90, %77 : vector<2x64xf32>
    %92 = vector.extract_strided_slice %89 {offsets = [0, 0], sizes = [2, 64], strides = [1, 1]} : vector<2x256xf32> to vector<2x64xf32>
    %93 = vector.extract_strided_slice %89 {offsets = [0, 192], sizes = [2, 64], strides = [1, 1]} : vector<2x256xf32> to vector<2x64xf32>
    %94 = arith.mulf %92, %93 : vector<2x64xf32>
    %95 = arith.addf %91, %94 : vector<2x64xf32>
    %96 = vector.extract_strided_slice %89 {offsets = [0, 128], sizes = [2, 64], strides = [1, 1]} : vector<2x256xf32> to vector<2x64xf32>
    %97 = math.tanh %95 : vector<2x64xf32>
    %98 = arith.mulf %96, %97 : vector<2x64xf32>
    %99 = arith.truncf %98 : vector<2x64xf32> to vector<2x64xbf16>
    %cst_14 = arith.constant dense<0.000000e+00> : vector<2x256xf32>
    %100 = tpu.matmul %99, %14, %cst_14 {dimension_numbers = #tpu.dot_dimension_numbers<[1], [0], [0], [1], [0, 0, 1, 1], [], []>} : vector<2x64xbf16>, vector<64x256xbf16>, vector<2x256xf32> -> vector<2x256xf32>
    %101 = vector.extract_strided_slice %13 {offsets = [0, 1280], sizes = [2, 256], strides = [1, 1]} : vector<2x2048xf32> to vector<2x256xf32>
    %102 = arith.addf %100, %101 : vector<2x256xf32>
    %103 = math.tanh %102 : vector<2x256xf32>
    %104 = vector.broadcast %5 : vector<1x256xf32> to vector<2x256xf32>
    %105 = arith.mulf %103, %104 : vector<2x256xf32>
    %106 = vector.broadcast %10 : vector<1x256xf32> to vector<2x256xf32>
    %107 = arith.addf %105, %106 : vector<2x256xf32>
    %108 = vector.extract_strided_slice %107 {offsets = [0, 64], sizes = [2, 64], strides = [1, 1]} : vector<2x256xf32> to vector<2x64xf32>
    %109 = arith.mulf %108, %95 : vector<2x64xf32>
    %110 = vector.extract_strided_slice %107 {offsets = [0, 0], sizes = [2, 64], strides = [1, 1]} : vector<2x256xf32> to vector<2x64xf32>
    %111 = vector.extract_strided_slice %107 {offsets = [0, 192], sizes = [2, 64], strides = [1, 1]} : vector<2x256xf32> to vector<2x64xf32>
    %112 = arith.mulf %110, %111 : vector<2x64xf32>
    %113 = arith.addf %109, %112 : vector<2x64xf32>
    %114 = vector.extract_strided_slice %107 {offsets = [0, 128], sizes = [2, 64], strides = [1, 1]} : vector<2x256xf32> to vector<2x64xf32>
    %115 = math.tanh %113 : vector<2x64xf32>
    %116 = arith.mulf %114, %115 : vector<2x64xf32>
    %117 = arith.truncf %116 : vector<2x64xf32> to vector<2x64xbf16>
    %cst_15 = arith.constant dense<0.000000e+00> : vector<2x256xf32>
    %118 = tpu.matmul %117, %14, %cst_15 {dimension_numbers = #tpu.dot_dimension_numbers<[1], [0], [0], [1], [0, 0, 1, 1], [], []>} : vector<2x64xbf16>, vector<64x256xbf16>, vector<2x256xf32> -> vector<2x256xf32>
    %119 = vector.extract_strided_slice %13 {offsets = [0, 1536], sizes = [2, 256], strides = [1, 1]} : vector<2x2048xf32> to vector<2x256xf32>
    %120 = arith.addf %118, %119 : vector<2x256xf32>
    %121 = math.tanh %120 : vector<2x256xf32>
    %122 = vector.broadcast %5 : vector<1x256xf32> to vector<2x256xf32>
    %123 = arith.mulf %121, %122 : vector<2x256xf32>
    %124 = vector.broadcast %10 : vector<1x256xf32> to vector<2x256xf32>
    %125 = arith.addf %123, %124 : vector<2x256xf32>
    %126 = vector.extract_strided_slice %125 {offsets = [0, 64], sizes = [2, 64], strides = [1, 1]} : vector<2x256xf32> to vector<2x64xf32>
    %127 = arith.mulf %126, %113 : vector<2x64xf32>
    %128 = vector.extract_strided_slice %125 {offsets = [0, 0], sizes = [2, 64], strides = [1, 1]} : vector<2x256xf32> to vector<2x64xf32>
    %129 = vector.extract_strided_slice %125 {offsets = [0, 192], sizes = [2, 64], strides = [1, 1]} : vector<2x256xf32> to vector<2x64xf32>
    %130 = arith.mulf %128, %129 : vector<2x64xf32>
    %131 = arith.addf %127, %130 : vector<2x64xf32>
    %132 = vector.extract_strided_slice %125 {offsets = [0, 128], sizes = [2, 64], strides = [1, 1]} : vector<2x256xf32> to vector<2x64xf32>
    %133 = math.tanh %131 : vector<2x64xf32>
    %134 = arith.mulf %132, %133 : vector<2x64xf32>
    %135 = arith.truncf %134 : vector<2x64xf32> to vector<2x64xbf16>
    %cst_16 = arith.constant dense<0.000000e+00> : vector<2x256xf32>
    %136 = tpu.matmul %135, %14, %cst_16 {dimension_numbers = #tpu.dot_dimension_numbers<[1], [0], [0], [1], [0, 0, 1, 1], [], []>} : vector<2x64xbf16>, vector<64x256xbf16>, vector<2x256xf32> -> vector<2x256xf32>
    %137 = vector.extract_strided_slice %13 {offsets = [0, 1792], sizes = [2, 256], strides = [1, 1]} : vector<2x2048xf32> to vector<2x256xf32>
    %138 = arith.addf %136, %137 : vector<2x256xf32>
    %139 = math.tanh %138 : vector<2x256xf32>
    %140 = vector.broadcast %5 : vector<1x256xf32> to vector<2x256xf32>
    %141 = arith.mulf %139, %140 : vector<2x256xf32>
    %142 = vector.broadcast %10 : vector<1x256xf32> to vector<2x256xf32>
    %143 = arith.addf %141, %142 : vector<2x256xf32>
    %144 = vector.extract_strided_slice %143 {offsets = [0, 64], sizes = [2, 64], strides = [1, 1]} : vector<2x256xf32> to vector<2x64xf32>
    %145 = arith.mulf %144, %131 : vector<2x64xf32>
    %146 = vector.extract_strided_slice %143 {offsets = [0, 0], sizes = [2, 64], strides = [1, 1]} : vector<2x256xf32> to vector<2x64xf32>
    %147 = vector.extract_strided_slice %143 {offsets = [0, 192], sizes = [2, 64], strides = [1, 1]} : vector<2x256xf32> to vector<2x64xf32>
    %148 = arith.mulf %146, %147 : vector<2x64xf32>
    %149 = arith.addf %145, %148 : vector<2x64xf32>
    %150 = vector.extract_strided_slice %143 {offsets = [0, 128], sizes = [2, 64], strides = [1, 1]} : vector<2x256xf32> to vector<2x64xf32>
    %151 = math.tanh %149 : vector<2x64xf32>
    %152 = arith.mulf %150, %151 : vector<2x64xf32>
    %cst_17 = arith.constant 0.000000e+00 : f32
    %153 = vector.broadcast %cst_17 : f32 to vector<2x64xf32>
    %154 = arith.maximumf %152, %153 : vector<2x64xf32>
    %cst_18 = arith.constant dense<0.000000e+00> : vector<2xf32>
    %155 = vector.multi_reduction <add>, %154, %cst_18 [1] : vector<2x64xf32> to vector<2xf32>
    %156 = vector.shape_cast %155 : vector<2xf32> to vector<2x1xf32>
    %cst_19 = arith.constant 6.400000e+01 : f32
    %157 = vector.broadcast %cst_19 : f32 to vector<2x1xf32>
    %158 = arith.divf %156, %157 : vector<2x1xf32>
    %159 = vector.broadcast %158 : vector<2x1xf32> to vector<2x64xf32>
    %160 = arith.subf %154, %159 : vector<2x64xf32>
    %161 = arith.mulf %160, %160 : vector<2x64xf32>
    %cst_20 = arith.constant dense<0.000000e+00> : vector<2xf32>
    %162 = vector.multi_reduction <add>, %161, %cst_20 [1] : vector<2x64xf32> to vector<2xf32>
    %163 = vector.shape_cast %162 : vector<2xf32> to vector<2x1xf32>
    %cst_21 = arith.constant 6.400000e+01 : f32
    %164 = vector.broadcast %cst_21 : f32 to vector<2x1xf32>
    %165 = arith.divf %163, %164 : vector<2x1xf32>
    %166 = vector.broadcast %158 : vector<2x1xf32> to vector<2x64xf32>
    %167 = arith.subf %154, %166 : vector<2x64xf32>
    %cst_22 = arith.constant 9.99999974E-6 : f32
    %168 = vector.broadcast %cst_22 : f32 to vector<2x1xf32>
    %169 = arith.addf %165, %168 : vector<2x1xf32>
    %170 = math.rsqrt %169 : vector<2x1xf32>
    %171 = vector.broadcast %170 : vector<2x1xf32> to vector<2x64xf32>
    %172 = arith.mulf %167, %171 : vector<2x64xf32>
    %c0_23 = arith.constant 0 : index
    %c0_24 = arith.constant 0 : index
    %173 = vector.load %arg4[%c0_23, %c0_24] : memref<1x512xf32, #tpu.memory_space<vmem>>, vector<1x64xf32>
    %174 = vector.broadcast %173 : vector<1x64xf32> to vector<2x64xf32>
    %175 = arith.mulf %172, %174 : vector<2x64xf32>
    %c0_25 = arith.constant 0 : index
    %c64 = arith.constant 64 : index
    %176 = vector.load %arg4[%c0_25, %c64] : memref<1x512xf32, #tpu.memory_space<vmem>>, vector<1x64xf32>
    %177 = vector.broadcast %176 : vector<1x64xf32> to vector<2x64xf32>
    %178 = arith.addf %175, %177 : vector<2x64xf32>
    %179 = arith.truncf %178 : vector<2x64xf32> to vector<2x64xbf16>
    %c0_26 = arith.constant 0 : index
    %c128 = arith.constant 128 : index
    %180 = vector.load %arg3[%c0_26, %c128] : memref<64x384xbf16, #tpu.memory_space<vmem>>, vector<64x128xbf16>
    %cst_27 = arith.constant dense<0.000000e+00> : vector<2x128xf32>
    %181 = tpu.matmul %179, %180, %cst_27 {dimension_numbers = #tpu.dot_dimension_numbers<[1], [0], [0], [1], [0, 0, 1, 1], [], []>} : vector<2x64xbf16>, vector<64x128xbf16>, vector<2x128xf32> -> vector<2x128xf32>
    %182 = vector.extract_strided_slice %181 {offsets = [0, 0], sizes = [2, 64], strides = [1, 1]} : vector<2x128xf32> to vector<2x64xf32>
    %183 = vector.extract_strided_slice %181 {offsets = [0, 64], sizes = [2, 64], strides = [1, 1]} : vector<2x128xf32> to vector<2x64xf32>
    %184 = arith.maximumf %182, %183 : vector<2x64xf32>
    %c0_28 = arith.constant 0 : index
    %c320 = arith.constant 320 : index
    %185 = vector.load %arg4[%c0_28, %c320] : memref<1x512xf32, #tpu.memory_space<vmem>>, vector<1x64xf32>
    %186 = vector.broadcast %185 : vector<1x64xf32> to vector<2x64xf32>
    %187 = arith.addf %184, %186 : vector<2x64xf32>
    %cst_29 = arith.constant 0.000000e+00 : f32
    %188 = vector.broadcast %cst_29 : f32 to vector<2x64xf32>
    %189 = arith.maximumf %187, %188 : vector<2x64xf32>
    %c0_30 = arith.constant 0 : index
    %c0_31 = arith.constant 0 : index
    %190 = vector.load %arg3[%c0_30, %c0_31] : memref<64x384xbf16, #tpu.memory_space<vmem>>, vector<64x64xbf16>
    %cst_32 = arith.constant dense<0.000000e+00> : vector<2x64xf32>
    %191 = tpu.matmul %179, %190, %cst_32 {dimension_numbers = #tpu.dot_dimension_numbers<[1], [0], [0], [1], [0, 0, 1, 1], [], []>} : vector<2x64xbf16>, vector<64x64xbf16>, vector<2x64xf32> -> vector<2x64xf32>
    %192 = arith.truncf %189 : vector<2x64xf32> to vector<2x64xbf16>
    %c0_33 = arith.constant 0 : index
    %c64_34 = arith.constant 64 : index
    %193 = vector.load %arg3[%c0_33, %c64_34] : memref<64x384xbf16, #tpu.memory_space<vmem>>, vector<64x64xbf16>
    %cst_35 = arith.constant dense<0.000000e+00> : vector<2x64xf32>
    %194 = tpu.matmul %192, %193, %cst_35 {dimension_numbers = #tpu.dot_dimension_numbers<[1], [0], [0], [1], [0, 0, 1, 1], [], []>} : vector<2x64xbf16>, vector<64x64xbf16>, vector<2x64xf32> -> vector<2x64xf32>
    %195 = arith.addf %191, %194 : vector<2x64xf32>
    %c0_36 = arith.constant 0 : index
    %c128_37 = arith.constant 128 : index
    %196 = vector.load %arg4[%c0_36, %c128_37] : memref<1x512xf32, #tpu.memory_space<vmem>>, vector<1x64xf32>
    %197 = vector.broadcast %196 : vector<1x64xf32> to vector<2x64xf32>
    %198 = arith.addf %195, %197 : vector<2x64xf32>
    %cst_38 = arith.constant 0.000000e+00 : f32
    %199 = vector.broadcast %cst_38 : f32 to vector<2x64xf32>
    %200 = arith.maximumf %198, %199 : vector<2x64xf32>
    %cst_39 = arith.constant dense<0.000000e+00> : vector<2xf32>
    %201 = vector.multi_reduction <add>, %200, %cst_39 [1] : vector<2x64xf32> to vector<2xf32>
    %202 = vector.shape_cast %201 : vector<2xf32> to vector<2x1xf32>
    %cst_40 = arith.constant 6.400000e+01 : f32
    %203 = vector.broadcast %cst_40 : f32 to vector<2x1xf32>
    %204 = arith.divf %202, %203 : vector<2x1xf32>
    %205 = vector.broadcast %204 : vector<2x1xf32> to vector<2x64xf32>
    %206 = arith.subf %200, %205 : vector<2x64xf32>
    %207 = arith.mulf %206, %206 : vector<2x64xf32>
    %cst_41 = arith.constant dense<0.000000e+00> : vector<2xf32>
    %208 = vector.multi_reduction <add>, %207, %cst_41 [1] : vector<2x64xf32> to vector<2xf32>
    %209 = vector.shape_cast %208 : vector<2xf32> to vector<2x1xf32>
    %cst_42 = arith.constant 6.400000e+01 : f32
    %210 = vector.broadcast %cst_42 : f32 to vector<2x1xf32>
    %211 = arith.divf %209, %210 : vector<2x1xf32>
    %212 = vector.broadcast %204 : vector<2x1xf32> to vector<2x64xf32>
    %213 = arith.subf %200, %212 : vector<2x64xf32>
    %cst_43 = arith.constant 9.99999974E-6 : f32
    %214 = vector.broadcast %cst_43 : f32 to vector<2x1xf32>
    %215 = arith.addf %211, %214 : vector<2x1xf32>
    %216 = math.rsqrt %215 : vector<2x1xf32>
    %217 = vector.broadcast %216 : vector<2x1xf32> to vector<2x64xf32>
    %218 = arith.mulf %213, %217 : vector<2x64xf32>
    %c0_44 = arith.constant 0 : index
    %c192 = arith.constant 192 : index
    %219 = vector.load %arg4[%c0_44, %c192] : memref<1x512xf32, #tpu.memory_space<vmem>>, vector<1x64xf32>
    %220 = vector.broadcast %219 : vector<1x64xf32> to vector<2x64xf32>
    %221 = arith.mulf %218, %220 : vector<2x64xf32>
    %c0_45 = arith.constant 0 : index
    %c256 = arith.constant 256 : index
    %222 = vector.load %arg4[%c0_45, %c256] : memref<1x512xf32, #tpu.memory_space<vmem>>, vector<1x64xf32>
    %223 = vector.broadcast %222 : vector<1x64xf32> to vector<2x64xf32>
    %224 = arith.addf %221, %223 : vector<2x64xf32>
    %225 = arith.truncf %224 : vector<2x64xf32> to vector<2x64xbf16>
    %c0_46 = arith.constant 0 : index
    %c256_47 = arith.constant 256 : index
    %226 = vector.load %arg3[%c0_46, %c256_47] : memref<64x384xbf16, #tpu.memory_space<vmem>>, vector<64x3xbf16>
    %cst_48 = arith.constant dense<0.000000e+00> : vector<2x3xf32>
    %227 = tpu.matmul %225, %226, %cst_48 {dimension_numbers = #tpu.dot_dimension_numbers<[1], [0], [0], [1], [0, 0, 1, 1], [], []>} : vector<2x64xbf16>, vector<64x3xbf16>, vector<2x3xf32> -> vector<2x3xf32>
    %c0_49 = arith.constant 0 : index
    %c384 = arith.constant 384 : index
    %228 = vector.load %arg4[%c0_49, %c384] : memref<1x512xf32, #tpu.memory_space<vmem>>, vector<1x3xf32>
    %229 = vector.broadcast %228 : vector<1x3xf32> to vector<2x3xf32>
    %230 = arith.addf %227, %229 : vector<2x3xf32>
    %c0_50 = arith.constant 0 : index
    %c0_51 = arith.constant 0 : index
    %231 = vector.load %arg5[%c0_50, %c0_51] : memref<2x3xf32, #tpu.memory_space<vmem>>, vector<2x3xf32>
    tpu.vector_store %arg5[%c0_50, %c0_51], %230 {strides = array<i32>} : memref<2x3xf32, #tpu.memory_space<vmem>>, vector<2x3xf32>,
    return
  }
}

</mosaic_0001>

<llo_original>
// kernel: lstm_cnn_forward.1
$region0: #{lstm_cnn_forward.1}
  #allocation0 [shape = 'u32[]', space=smem, size = 0x4, offset = 0x4, fixed_abs, tag = 'smem constant byte address 0x4 - core index']
  #allocation1 [shape = 'u32[144,128]{1,0:T(1,128)}', space=vmem, size = 0x12000, scoped, tag = 'internal scratch']
  %s0 = inlined_call_operand.vmem [shape: bf16[2,33], index: 0, kind: input, shape index: {}]
  %s1 = inlined_call_operand.hbm [shape: bf16[33,2048], index: 1, kind: input, shape index: {}]
  %s2 = inlined_call_operand.hbm [shape: bf16[64,256], index: 2, kind: input, shape index: {}]
  %s3 = inlined_call_operand.hbm [shape: bf16[64,384], index: 3, kind: input, shape index: {}]
  %s4 = inlined_call_operand.vmem [shape: f32[1,512], index: 4, kind: input, shape index: {}]
  %s5 = inlined_call_operand.hbm [shape: f32[2,3], index: 5, kind: output, shape index: {}]
  %s6 = sld [smem:[#allocation0]]
  $region42: #{lstm_cnn_forward.1} parent=0
    _
  %s8 = ssub.s32 1, %s6
  %s9 = scalar_select 0, %s8, %s6
  $region1: #{lstm_cnn_forward.1} parent=0
    #allocation2 [shape = 'u8[163840]{0}', space=vmem, size = 0x28000, scoped, tag = 'input window, operand 1, single buffered']
    #allocation3 [shape = 's32[1]{0}', space=sflag, size = 0x4, scoped, tag = 'scoped memory for lstm_cnn_forward.1']
    #allocation4 [shape = 's32[1]{0}', space=sflag, size = 0x4, scoped, tag = 'scoped memory for lstm_cnn_forward.1']
    #allocation5 [shape = 'u8[32768]{0}', space=vmem, size = 0x8000, scoped, tag = 'input window, operand 2, single buffered']
    #allocation6 [shape = 's32[1]{0}', space=sflag, size = 0x4, scoped, tag = 'scoped memory for lstm_cnn_forward.1']
    #allocation7 [shape = 'u8[49152]{0}', space=vmem, size = 0xc000, scoped, tag = 'input window, operand 3, single buffered']
    #allocation8 [shape = 'u8[1024]{0}', space=vmem, size = 0x400, scoped, tag = 'output window, operand 0, single buffered']
    %10 = vsyncpa [#allocation3], 0
    %11 = vsyncpa [#allocation6], 0
    %12 = vsyncpa [#allocation4], 0
    // Predicated region
    $region2: #{lstm_cnn_forward.1} parent=1 // pred_check
      _
    $region3: #{lstm_cnn_forward.1} parent=1 // pred_check_branch
      %14 = sbr.rel (0) target = $region5
    $region4: #{lstm_cnn_forward.1} parent=1 // pred_region
      _
    $region5: #{lstm_cnn_forward.1} parent=1 // pred_fallthru
      _
    // Predicated region
    $region6: #{lstm_cnn_forward.1} parent=1 // pred_check
      _
    $region7: #{lstm_cnn_forward.1} parent=1 // pred_check_branch
      %16 = sbr.rel (0) target = $region9
    $region8: #{lstm_cnn_forward.1} parent=1 // pred_region
      %s18 = ssub.s32 5120, 5120
      %19 = vsyncadd [#allocation3], %s18
      %s20 = sshll.u32 [#allocation2], 4
      %s21 = int_to_ptr.vmem [resolvable:$true] %s20
      %26 = dma.hbm_to_vmem [thread:$0]  %s1, 5120, %s21, [#allocation3], 1024, 1024, 64
    $region9: #{lstm_cnn_forward.1} parent=1 // pred_fallthru
      _
    // Predicated region
    $region10: #{lstm_cnn_forward.1} parent=1 // pred_check
      _
    $region11: #{lstm_cnn_forward.1} parent=1 // pred_check_branch
      %28 = sbr.rel (0) target = $region13
    $region12: #{lstm_cnn_forward.1} parent=1 // pred_region
      %s30 = ssub.s32 1024, 1024
      %31 = vsyncadd [#allocation6], %s30
      %s32 = sshll.u32 [#allocation5], 4
      %s33 = int_to_ptr.vmem [resolvable:$true] %s32
      %38 = dma.hbm_to_vmem [thread:$0]  %s2, 1024, %s33, [#allocation6], 128, 128, 8
    $region13: #{lstm_cnn_forward.1} parent=1 // pred_fallthru
      _
    // Predicated region
    $region14: #{lstm_cnn_forward.1} parent=1 // pred_check
      _
    $region15: #{lstm_cnn_forward.1} parent=1 // pred_check_branch
      %40 = sbr.rel (0) target = $region17
    $region16: #{lstm_cnn_forward.1} parent=1 // pred_region
      %s42 = ssub.s32 1536, 1536
      %43 = vsyncadd [#allocation6], %s42
      %s44 = sshll.u32 [#allocation7], 4
      %s45 = int_to_ptr.vmem [resolvable:$true] %s44
      %50 = dma.hbm_to_vmem [thread:$0]  %s3, 1536, %s45, [#allocation6], 192, 192, 12
    $region17: #{lstm_cnn_forward.1} parent=1 // pred_fallthru
      _
    // Predicated region
    $region18: #{lstm_cnn_forward.1} parent=1 // pred_check
      _
    $region19: #{lstm_cnn_forward.1} parent=1 // pred_check_branch
      %52 = sbr.rel (0) target = $region21
    $region20: #{lstm_cnn_forward.1} parent=1 // pred_region
      _
    $region21: #{lstm_cnn_forward.1} parent=1 // pred_fallthru
      _
    // Predicated region
    $region22: #{lstm_cnn_forward.1} parent=1 // pred_check
      _
    $region23: #{lstm_cnn_forward.1} parent=1 // pred_check_branch
      %54 = sbr.rel (0) target = $region25
    $region24: #{lstm_cnn_forward.1} parent=1 // pred_region
      %55 = dma.done [#allocation3], 5120
    $region25: #{lstm_cnn_forward.1} parent=1 // pred_fallthru
      _
    // Predicated region
    $region26: #{lstm_cnn_forward.1} parent=1 // pred_check
      _
    $region27: #{lstm_cnn_forward.1} parent=1 // pred_check_branch
      %57 = sbr.rel (0) target = $region29
    $region28: #{lstm_cnn_forward.1} parent=1 // pred_region
      %58 = dma.done [#allocation6], 1024
    $region29: #{lstm_cnn_forward.1} parent=1 // pred_fallthru
      _
    // Predicated region
    $region30: #{lstm_cnn_forward.1} parent=1 // pred_check
      _
    $region31: #{lstm_cnn_forward.1} parent=1 // pred_check_branch
      %60 = sbr.rel (0) target = $region33
    $region32: #{lstm_cnn_forward.1} parent=1 // pred_region
      %61 = dma.done [#allocation6], 1536
    $region33: #{lstm_cnn_forward.1} parent=1 // pred_fallthru
      _
    %v63 = vlaneseq
    %v64 = vand.u32 %v63, 127
    %v65 = vadd.s32 %v64, 128
    %vm66 = vcmp.lt.s32.totalorder %v64, 192
    %vm67 = vcmp.lt.s32.totalorder %v65, 192
    %v68 = vsel %vm66, 0.5, 1.0
    %v69 = vsel %vm67, 0.5, 1.0
    %v70 = vsel %vm66, 0.5, 0.0
    %v71 = vsel %vm67, 0.5, 0.0
    %v72 = vld [vmem:[%s0] sm:$0x1]
    %v73 = vld [vmem:[#allocation2] sm:$0xff]
    %v74 = vld [vmem:[#allocation2 + $0x8] sm:$0xff]
    %v75 = vld [vmem:[#allocation2 + $0x10] sm:$0xff]
    %v76 = vld [vmem:[#allocation2 + $0x18] sm:$0xff]
    %v77 = vld [vmem:[#allocation2 + $0x20] sm:$0xff]
    %v78 = vld [vmem:[#allocation2 + $0x28] sm:$0xff]
    %v79 = vld [vmem:[#allocation2 + $0x30] sm:$0xff]
    %v80 = vld [vmem:[#allocation2 + $0x38] sm:$0xff]
    %v81 = vld [vmem:[#allocation2 + $0x40] sm:$0xff]
    %v82 = vld [vmem:[#allocation2 + $0x48] sm:$0xff]
    %v83 = vld [vmem:[#allocation2 + $0x50] sm:$0xff]
    %v84 = vld [vmem:[#allocation2 + $0x58] sm:$0xff]
    %v85 = vld [vmem:[#allocation2 + $0x60] sm:$0xff]
    %v86 = vld [vmem:[#allocation2 + $0x68] sm:$0xff]
    %v87 = vld [vmem:[#allocation2 + $0x70] sm:$0xff]
    %v88 = vld [vmem:[#allocation2 + $0x78] sm:$0xff]
    %v89 = vld [vmem:[#allocation2 + $0x80] sm:$0xff]
    %v90 = vld [vmem:[#allocation2 + $0x88] sm:$0xff]
    %v91 = vld [vmem:[#allocation2 + $0x90] sm:$0xff]
    %v92 = vld [vmem:[#allocation2 + $0x98] sm:$0xff]
    %v93 = vld [vmem:[#allocation2 + $0xa0] sm:$0xff]
    %v94 = vld [vmem:[#allocation2 + $0xa8] sm:$0xff]
    %v95 = vld [vmem:[#allocation2 + $0xb0] sm:$0xff]
    %v96 = vld [vmem:[#allocation2 + $0xb8] sm:$0xff]
    %v97 = vld [vmem:[#allocation2 + $0xc0] sm:$0xff]
    %v98 = vld [vmem:[#allocation2 + $0xc8] sm:$0xff]
    %v99 = vld [vmem:[#allocation2 + $0xd0] sm:$0xff]
    %v100 = vld [vmem:[#allocation2 + $0xd8] sm:$0xff]
    %v101 = vld [vmem:[#allocation2 + $0xe0] sm:$0xff]
    %v102 = vld [vmem:[#allocation2 + $0xe8] sm:$0xff]
    %v103 = vld [vmem:[#allocation2 + $0xf0] sm:$0xff]
    %v104 = vld [vmem:[#allocation2 + $0xf8] sm:$0xff]
    %v105 = vld [vmem:[#allocation2 + $0x100] sm:$0x11]
    %v106 = vld [vmem:[#allocation2 + $0x108] sm:$0x11]
    %v107 = vld [vmem:[#allocation2 + $0x110] sm:$0x11]
    %v108 = vld [vmem:[#allocation2 + $0x118] sm:$0x11]
    %v109 = vld [vmem:[#allocation2 + $0x120] sm:$0x11]
    %v110 = vld [vmem:[#allocation2 + $0x128] sm:$0x11]
    %v111 = vld [vmem:[#allocation2 + $0x130] sm:$0x11]
    %v112 = vld [vmem:[#allocation2 + $0x138] sm:$0x11]
    %v153 = vunpack.c.l.b16 %v73
    %v154 = vunpack.c.h.b16 %v73
    %v155 = vunpack.c.l.b16 %v74
    %v156 = vunpack.c.h.b16 %v74
    %v157 = vunpack.c.l.b16 %v75
    %v158 = vunpack.c.h.b16 %v75
    %v159 = vunpack.c.l.b16 %v76
    %v160 = vunpack.c.h.b16 %v76
    %v161 = vunpack.c.l.b16 %v77
    %v162 = vunpack.c.h.b16 %v77
    %v163 = vunpack.c.l.b16 %v78
    %v164 = vunpack.c.h.b16 %v78
    %v165 = vunpack.c.l.b16 %v79
    %v166 = vunpack.c.h.b16 %v79
    %v167 = vunpack.c.l.b16 %v80
    %v168 = vunpack.c.h.b16 %v80
    %v169 = vunpack.c.l.b16 %v81
    %v170 = vunpack.c.h.b16 %v81
    %v171 = vunpack.c.l.b16 %v82
    %v172 = vunpack.c.h.b16 %v82
    %v173 = vunpack.c.l.b16 %v83
    %v174 = vunpack.c.h.b16 %v83
    %v175 = vunpack.c.l.b16 %v84
    %v176 = vunpack.c.h.b16 %v84
    %v177 = vunpack.c.l.b16 %v85
    %v178 = vunpack.c.h.b16 %v85
    %v179 = vunpack.c.l.b16 %v86
    %v180 = vunpack.c.h.b16 %v86
    %v181 = vunpack.c.l.b16 %v87
    %v182 = vunpack.c.h.b16 %v87
    %v183 = vunpack.c.l.b16 %v88
    %v184 = vunpack.c.h.b16 %v88
    %v185 = vunpack.c.l.b16 %v89
    %v186 = vunpack.c.h.b16 %v89
    %v187 = vunpack.c.l.b16 %v90
    %v188 = vunpack.c.h.b16 %v90
    %v189 = vunpack.c.l.b16 %v91
    %v190 = vunpack.c.h.b16 %v91
    %v191 = vunpack.c.l.b16 %v92
    %v192 = vunpack.c.h.b16 %v92
    %v193 = vunpack.c.l.b16 %v93
    %v194 = vunpack.c.h.b16 %v93
    %v195 = vunpack.c.l.b16 %v94
    %v196 = vunpack.c.h.b16 %v94
    %v197 = vunpack.c.l.b16 %v95
    %v198 = vunpack.c.h.b16 %v95
    %v199 = vunpack.c.l.b16 %v96
    %v200 = vunpack.c.h.b16 %v96
    %v201 = vunpack.c.l.b16 %v97
    %v202 = vunpack.c.h.b16 %v97
    %v203 = vunpack.c.l.b16 %v98
    %v204 = vunpack.c.h.b16 %v98
    %v205 = vunpack.c.l.b16 %v99
    %v206 = vunpack.c.h.b16 %v99
    %v207 = vunpack.c.l.b16 %v100
    %v208 = vunpack.c.h.b16 %v100
    %v209 = vunpack.c.l.b16 %v101
    %v210 = vunpack.c.h.b16 %v101
    %v211 = vunpack.c.l.b16 %v102
    %v212 = vunpack.c.h.b16 %v102
    %v213 = vunpack.c.l.b16 %v103
    %v214 = vunpack.c.h.b16 %v103
    %v215 = vunpack.c.l.b16 %v104
    %v216 = vunpack.c.h.b16 %v104
    %v217 = vunpack.c.l.b16 %v105
    %v218 = vunpack.c.h.b16 %v105
    %v219 = vunpack.c.l.b16 %v106
    %v220 = vunpack.c.h.b16 %v106
    %v221 = vunpack.c.l.b16 %v107
    %v222 = vunpack.c.h.b16 %v107
    %v223 = vunpack.c.l.b16 %v108
    %v224 = vunpack.c.h.b16 %v108
    %v225 = vunpack.c.l.b16 %v109
    %v226 = vunpack.c.h.b16 %v109
    %v227 = vunpack.c.l.b16 %v110
    %v228 = vunpack.c.h.b16 %v110
    %v229 = vunpack.c.l.b16 %v111
    %v230 = vunpack.c.h.b16 %v111
    %v231 = vunpack.c.l.b16 %v112
    %v232 = vunpack.c.h.b16 %v112
    %v233 = vpack.c.b16 %v169, %v153
    %v234 = vpack.c.b16 %v170, %v154
    %v235 = vpack.c.b16 %v171, %v155
    %v236 = vpack.c.b16 %v172, %v156
    %v237 = vpack.c.b16 %v173, %v157
    %v238 = vpack.c.b16 %v174, %v158
    %v239 = vpack.c.b16 %v175, %v159
    %v240 = vpack.c.b16 %v176, %v160
    %v241 = vpack.c.b16 %v177, %v161
    %v242 = vpack.c.b16 %v178, %v162
    %v243 = vpack.c.b16 %v179, %v163
    %v244 = vpack.c.b16 %v180, %v164
    %v245 = vpack.c.b16 %v181, %v165
    %v246 = vpack.c.b16 %v182, %v166
    %v247 = vpack.c.b16 %v183, %v167
    %v248 = vpack.c.b16 %v184, %v168
    %v249 = vpack.c.b16 %v201, %v185
    %v250 = vpack.c.b16 %v202, %v186
    %v251 = vpack.c.b16 %v203, %v187
    %v252 = vpack.c.b16 %v204, %v188
    %v253 = vpack.c.b16 %v205, %v189
    %v254 = vpack.c.b16 %v206, %v190
    %v255 = vpack.c.b16 %v207, %v191
    %v256 = vpack.c.b16 %v208, %v192
    %v257 = vpack.c.b16 %v209, %v193
    %v258 = vpack.c.b16 %v210, %v194
    %v259 = vpack.c.b16 %v211, %v195
    %v260 = vpack.c.b16 %v212, %v196
    %v261 = vpack.c.b16 %v213, %v197
    %v262 = vpack.c.b16 %v214, %v198
    %v263 = vpack.c.b16 %v215, %v199
    %v264 = vpack.c.b16 %v216, %v200
    %v265 = vpack.c.b16 %v217, %v217
    %v266 = vpack.c.b16 %v218, %v218
    %v267 = vpack.c.b16 %v219, %v219
    %v268 = vpack.c.b16 %v220, %v220
    %v269 = vpack.c.b16 %v221, %v221
    %v270 = vpack.c.b16 %v222, %v222
    %v271 = vpack.c.b16 %v223, %v223
    %v272 = vpack.c.b16 %v224, %v224
    %v273 = vpack.c.b16 %v225, %v225
    %v274 = vpack.c.b16 %v226, %v226
    %v275 = vpack.c.b16 %v227, %v227
    %v276 = vpack.c.b16 %v228, %v228
    %v277 = vpack.c.b16 %v229, %v229
    %v278 = vpack.c.b16 %v230, %v230
    %v279 = vpack.c.b16 %v231, %v231
    %v280 = vpack.c.b16 %v232, %v232
    %vm313 = vcmask 269312
    %v315 = vsel %vm313, %v72, 0
    %vm317 = vcmask 1040384
    %v318 = vsel 0, 4294967295, 65535
    %v319 = vsel %vm317, %v318, 0
    %v321 = vand.u32 %v265, %v319
    %v324 = vand.u32 %v266, %v319
    %v327 = vand.u32 %v267, %v319
    %v330 = vand.u32 %v268, %v319
    %v333 = vand.u32 %v269, %v319
    %v336 = vand.u32 %v270, %v319
    %v339 = vand.u32 %v271, %v319
    %v342 = vand.u32 %v272, %v319
    %v345 = vand.u32 %v273, %v319
    %v348 = vand.u32 %v274, %v319
    %v351 = vand.u32 %v275, %v319
    %v354 = vand.u32 %v276, %v319
    %v357 = vand.u32 %v277, %v319
    %v360 = vand.u32 %v278, %v319
    %v363 = vand.u32 %v279, %v319
    %v366 = vand.u32 %v280, %v319
    %368 = vmatprep.subr.bf16.mxu0 %v234
    %369 = vmatpush1.bf16.msra.mxu0 %v233
    %370 = vmatprep.subr.bf16.mxu0 %v250
    %371 = vmatpush1.bf16.msra.mxu0 %v249
    %372 = vmatprep.subr.bf16.mxu0 %v324
    %373 = vmatpush1.bf16.msra.mxu0 %v321
    %374 = vmatprep.subr.bf16.mxu0 0
    %375 = vmatpush1.bf16.msra.mxu0 0
    %376 = vmatprep.subr.bf16.mxu0 0
    %377 = vmatpush1.bf16.msra.mxu0 0
    %378 = vmatprep.subr.bf16.mxu0 0
    %379 = vmatpush1.bf16.msra.mxu0 0
    %380 = vmatprep.subr.bf16.mxu0 0
    %381 = vmatpush1.bf16.msra.mxu0 0
    %382 = vmatprep.subr.bf16.mxu0 0
    %383 = vmatpush1.bf16.msra.mxu0 0
    %384 = vmatprep.subr.bf16.mxu0 0
    %385 = vmatpush1.bf16.msra.mxu0 0
    %386 = vmatprep.subr.bf16.mxu0 0
    %387 = vmatpush1.bf16.msra.mxu0 0
    %388 = vmatprep.subr.bf16.mxu0 0
    %389 = vmatpush1.bf16.msra.mxu0 0
    %390 = vmatprep.subr.bf16.mxu0 0
    %391 = vmatpush1.bf16.msra.mxu0 0
    %392 = vmatprep.subr.bf16.mxu0 0
    %393 = vmatpush1.bf16.msra.mxu0 0
    %394 = vmatprep.subr.bf16.mxu0 0
    %395 = vmatpush1.bf16.msra.mxu0 0
    %396 = vmatprep.subr.bf16.mxu0 0
    %397 = vmatpush1.bf16.msra.mxu0 0
    %398 = vmatprep.subr.bf16.mxu0 0
    %399 = vmatpush1.bf16.msra.mxu0 0
    %400 = vmatprep.mubr.bf16.mxu0 0
    %401 = vmatmul.mubr.bf16.gmra.mrb[0].mxu0 %v315
    %v402 = vpop.f32.mrb[0].mxu0
    %v403 = vadd.f32 0.0, %v402
    %v404 = vpop.f32.mrb[0].mxu0
    %v405 = vadd.f32 0.0, %v404
    %v406 = vpop.f32.mrb[0].mxu0
    %v407 = vpop.f32.mrb[0].mxu0
    %408 = vdwg.mxu0
    %409 = vmatprep.subr.bf16.mxu0 %v236
    %410 = vmatpush1.bf16.msra.mxu0 %v235
    %411 = vmatprep.subr.bf16.mxu0 %v252
    %412 = vmatpush1.bf16.msra.mxu0 %v251
    %413 = vmatprep.subr.bf16.mxu0 %v330
    %414 = vmatpush1.bf16.msra.mxu0 %v327
    %415 = vmatprep.subr.bf16.mxu0 0
    %416 = vmatpush1.bf16.msra.mxu0 0
    %417 = vmatprep.subr.bf16.mxu0 0
    %418 = vmatpush1.bf16.msra.mxu0 0
    %419 = vmatprep.subr.bf16.mxu0 0
    %420 = vmatpush1.bf16.msra.mxu0 0
    %421 = vmatprep.subr.bf16.mxu0 0
    %422 = vmatpush1.bf16.msra.mxu0 0
    %423 = vmatprep.subr.bf16.mxu0 0
    %424 = vmatpush1.bf16.msra.mxu0 0
    %425 = vmatprep.subr.bf16.mxu0 0
    %426 = vmatpush1.bf16.msra.mxu0 0
    %427 = vmatprep.subr.bf16.mxu0 0
    %428 = vmatpush1.bf16.msra.mxu0 0
    %429 = vmatprep.subr.bf16.mxu0 0
    %430 = vmatpush1.bf16.msra.mxu0 0
    %431 = vmatprep.subr.bf16.mxu0 0
    %432 = vmatpush1.bf16.msra.mxu0 0
    %433 = vmatprep.subr.bf16.mxu0 0
    %434 = vmatpush1.bf16.msra.mxu0 0
    %435 = vmatprep.subr.bf16.mxu0 0
    %436 = vmatpush1.bf16.msra.mxu0 0
    %437 = vmatprep.subr.bf16.mxu0 0
    %438 = vmatpush1.bf16.msra.mxu0 0
    %439 = vmatprep.subr.bf16.mxu0 0
    %440 = vmatpush1.bf16.msra.mxu0 0
    %441 = vmatprep.mubr.bf16.mxu0 0
    %442 = vmatmul.mubr.bf16.gmra.mrb[0].mxu0 %v315
    %v443 = vpop.f32.mrb[0].mxu0
    %v444 = vadd.f32 0.0, %v443
    %v445 = vpop.f32.mrb[0].mxu0
    %v446 = vadd.f32 0.0, %v445
    %v447 = vpop.f32.mrb[0].mxu0
    %v448 = vpop.f32.mrb[0].mxu0
    %449 = vdwg.mxu0
    %450 = vmatprep.subr.bf16.mxu0 %v238
    %451 = vmatpush1.bf16.msra.mxu0 %v237
    %452 = vmatprep.subr.bf16.mxu0 %v254
    %453 = vmatpush1.bf16.msra.mxu0 %v253
    %454 = vmatprep.subr.bf16.mxu0 %v336
    %455 = vmatpush1.bf16.msra.mxu0 %v333
    %456 = vmatprep.subr.bf16.mxu0 0
    %457 = vmatpush1.bf16.msra.mxu0 0
    %458 = vmatprep.subr.bf16.mxu0 0
    %459 = vmatpush1.bf16.msra.mxu0 0
    %460 = vmatprep.subr.bf16.mxu0 0
    %461 = vmatpush1.bf16.msra.mxu0 0
    %462 = vmatprep.subr.bf16.mxu0 0
    %463 = vmatpush1.bf16.msra.mxu0 0
    %464 = vmatprep.subr.bf16.mxu0 0
    %465 = vmatpush1.bf16.msra.mxu0 0
    %466 = vmatprep.subr.bf16.mxu0 0
    %467 = vmatpush1.bf16.msra.mxu0 0
    %468 = vmatprep.subr.bf16.mxu0 0
    %469 = vmatpush1.bf16.msra.mxu0 0
    %470 = vmatprep.subr.bf16.mxu0 0
    %471 = vmatpush1.bf16.msra.mxu0 0
    %472 = vmatprep.subr.bf16.mxu0 0
    %473 = vmatpush1.bf16.msra.mxu0 0
    %474 = vmatprep.subr.bf16.mxu0 0
    %475 = vmatpush1.bf16.msra.mxu0 0
    %476 = vmatprep.subr.bf16.mxu0 0
    %477 = vmatpush1.bf16.msra.mxu0 0
    %478 = vmatprep.subr.bf16.mxu0 0
    %479 = vmatpush1.bf16.msra.mxu0 0
    %480 = vmatprep.subr.bf16.mxu0 0
    %481 = vmatpush1.bf16.msra.mxu0 0
    %482 = vmatprep.mubr.bf16.mxu0 0
    %483 = vmatmul.mubr.bf16.gmra.mrb[0].mxu0 %v315
    %v484 = vpop.f32.mrb[0].mxu0
    %v485 = vadd.f32 0.0, %v484
    %v486 = vpop.f32.mrb[0].mxu0
    %v487 = vadd.f32 0.0, %v486
    %v488 = vpop.f32.mrb[0].mxu0
    %v489 = vpop.f32.mrb[0].mxu0
    %490 = vdwg.mxu0
    %491 = vmatprep.subr.bf16.mxu0 %v240
    %492 = vmatpush1.bf16.msra.mxu0 %v239
    %493 = vmatprep.subr.bf16.mxu0 %v256
    %494 = vmatpush1.bf16.msra.mxu0 %v255
    %495 = vmatprep.subr.bf16.mxu0 %v342
    %496 = vmatpush1.bf16.msra.mxu0 %v339
    %497 = vmatprep.subr.bf16.mxu0 0
    %498 = vmatpush1.bf16.msra.mxu0 0
    %499 = vmatprep.subr.bf16.mxu0 0
    %500 = vmatpush1.bf16.msra.mxu0 0
    %501 = vmatprep.subr.bf16.mxu0 0
    %502 = vmatpush1.bf16.msra.mxu0 0
    %503 = vmatprep.subr.bf16.mxu0 0
    %504 = vmatpush1.bf16.msra.mxu0 0
    %505 = vmatprep.subr.bf16.mxu0 0
    %506 = vmatpush1.bf16.msra.mxu0 0
    %507 = vmatprep.subr.bf16.mxu0 0
    %508 = vmatpush1.bf16.msra.mxu0 0
    %509 = vmatprep.subr.bf16.mxu0 0
    %510 = vmatpush1.bf16.msra.mxu0 0
    %511 = vmatprep.subr.bf16.mxu0 0
    %512 = vmatpush1.bf16.msra.mxu0 0
    %513 = vmatprep.subr.bf16.mxu0 0
    %514 = vmatpush1.bf16.msra.mxu0 0
    %515 = vmatprep.subr.bf16.mxu0 0
    %516 = vmatpush1.bf16.msra.mxu0 0
    %517 = vmatprep.subr.bf16.mxu0 0
    %518 = vmatpush1.bf16.msra.mxu0 0
    %519 = vmatprep.subr.bf16.mxu0 0
    %520 = vmatpush1.bf16.msra.mxu0 0
    %521 = vmatprep.subr.bf16.mxu0 0
    %522 = vmatpush1.bf16.msra.mxu0 0
    %523 = vmatprep.mubr.bf16.mxu0 0
    %524 = vmatmul.mubr.bf16.gmra.mrb[0].mxu0 %v315
    %v525 = vpop.f32.mrb[0].mxu0
    %v526 = vadd.f32 0.0, %v525
    %v527 = vpop.f32.mrb[0].mxu0
    %v528 = vadd.f32 0.0, %v527
    %v529 = vpop.f32.mrb[0].mxu0
    %v530 = vpop.f32.mrb[0].mxu0
    %531 = vdwg.mxu0
    %532 = vmatprep.subr.bf16.mxu0 %v242
    %533 = vmatpush1.bf16.msra.mxu0 %v241
    %534 = vmatprep.subr.bf16.mxu0 %v258
    %535 = vmatpush1.bf16.msra.mxu0 %v257
    %536 = vmatprep.subr.bf16.mxu0 %v348
    %537 = vmatpush1.bf16.msra.mxu0 %v345
    %538 = vmatprep.subr.bf16.mxu0 0
    %539 = vmatpush1.bf16.msra.mxu0 0
    %540 = vmatprep.subr.bf16.mxu0 0
    %541 = vmatpush1.bf16.msra.mxu0 0
    %542 = vmatprep.subr.bf16.mxu0 0
    %543 = vmatpush1.bf16.msra.mxu0 0
    %544 = vmatprep.subr.bf16.mxu0 0
    %545 = vmatpush1.bf16.msra.mxu0 0
    %546 = vmatprep.subr.bf16.mxu0 0
    %547 = vmatpush1.bf16.msra.mxu0 0
    %548 = vmatprep.subr.bf16.mxu0 0
    %549 = vmatpush1.bf16.msra.mxu0 0
    %550 = vmatprep.subr.bf16.mxu0 0
    %551 = vmatpush1.bf16.msra.mxu0 0
    %552 = vmatprep.subr.bf16.mxu0 0
    %553 = vmatpush1.bf16.msra.mxu0 0
    %554 = vmatprep.subr.bf16.mxu0 0
    %555 = vmatpush1.bf16.msra.mxu0 0
    %556 = vmatprep.subr.bf16.mxu0 0
    %557 = vmatpush1.bf16.msra.mxu0 0
    %558 = vmatprep.subr.bf16.mxu0 0
    %559 = vmatpush1.bf16.msra.mxu0 0
    %560 = vmatprep.subr.bf16.mxu0 0
    %561 = vmatpush1.bf16.msra.mxu0 0
    %562 = vmatprep.subr.bf16.mxu0 0
    %563 = vmatpush1.bf16.msra.mxu0 0
    %564 = vmatprep.mubr.bf16.mxu0 0
    %565 = vmatmul.mubr.bf16.gmra.mrb[0].mxu0 %v315
    %v566 = vpop.f32.mrb[0].mxu0
    %v567 = vadd.f32 0.0, %v566
    %v568 = vpop.f32.mrb[0].mxu0
    %v569 = vadd.f32 0.0, %v568
    %v570 = vpop.f32.mrb[0].mxu0
    %v571 = vpop.f32.mrb[0].mxu0
    %572 = vdwg.mxu0
    %573 = vmatprep.subr.bf16.mxu0 %v244
    %574 = vmatpush1.bf16.msra.mxu0 %v243
    %575 = vmatprep.subr.bf16.mxu0 %v260
    %576 = vmatpush1.bf16.msra.mxu0 %v259
    %577 = vmatprep.subr.bf16.mxu0 %v354
    %578 = vmatpush1.bf16.msra.mxu0 %v351
    %579 = vmatprep.subr.bf16.mxu0 0
    %580 = vmatpush1.bf16.msra.mxu0 0
    %581 = vmatprep.subr.bf16.mxu0 0
    %582 = vmatpush1.bf16.msra.mxu0 0
    %583 = vmatprep.subr.bf16.mxu0 0
    %584 = vmatpush1.bf16.msra.mxu0 0
    %585 = vmatprep.subr.bf16.mxu0 0
    %586 = vmatpush1.bf16.msra.mxu0 0
    %587 = vmatprep.subr.bf16.mxu0 0
    %588 = vmatpush1.bf16.msra.mxu0 0
    %589 = vmatprep.subr.bf16.mxu0 0
    %590 = vmatpush1.bf16.msra.mxu0 0
    %591 = vmatprep.subr.bf16.mxu0 0
    %592 = vmatpush1.bf16.msra.mxu0 0
    %593 = vmatprep.subr.bf16.mxu0 0
    %594 = vmatpush1.bf16.msra.mxu0 0
    %595 = vmatprep.subr.bf16.mxu0 0
    %596 = vmatpush1.bf16.msra.mxu0 0
    %597 = vmatprep.subr.bf16.mxu0 0
    %598 = vmatpush1.bf16.msra.mxu0 0
    %599 = vmatprep.subr.bf16.mxu0 0
    %600 = vmatpush1.bf16.msra.mxu0 0
    %601 = vmatprep.subr.bf16.mxu0 0
    %602 = vmatpush1.bf16.msra.mxu0 0
    %603 = vmatprep.subr.bf16.mxu0 0
    %604 = vmatpush1.bf16.msra.mxu0 0
    %605 = vmatprep.mubr.bf16.mxu0 0
    %606 = vmatmul.mubr.bf16.gmra.mrb[0].mxu0 %v315
    %v607 = vpop.f32.mrb[0].mxu0
    %v608 = vadd.f32 0.0, %v607
    %v609 = vpop.f32.mrb[0].mxu0
    %v610 = vadd.f32 0.0, %v609
    %v611 = vpop.f32.mrb[0].mxu0
    %v612 = vpop.f32.mrb[0].mxu0
    %613 = vdwg.mxu0
    %614 = vmatprep.subr.bf16.mxu0 %v246
    %615 = vmatpush1.bf16.msra.mxu0 %v245
    %616 = vmatprep.subr.bf16.mxu0 %v262
    %617 = vmatpush1.bf16.msra.mxu0 %v261
    %618 = vmatprep.subr.bf16.mxu0 %v360
    %619 = vmatpush1.bf16.msra.mxu0 %v357
    %620 = vmatprep.subr.bf16.mxu0 0
    %621 = vmatpush1.bf16.msra.mxu0 0
    %622 = vmatprep.subr.bf16.mxu0 0
    %623 = vmatpush1.bf16.msra.mxu0 0
    %624 = vmatprep.subr.bf16.mxu0 0
    %625 = vmatpush1.bf16.msra.mxu0 0
    %626 = vmatprep.subr.bf16.mxu0 0
    %627 = vmatpush1.bf16.msra.mxu0 0
    %628 = vmatprep.subr.bf16.mxu0 0
    %629 = vmatpush1.bf16.msra.mxu0 0
    %630 = vmatprep.subr.bf16.mxu0 0
    %631 = vmatpush1.bf16.msra.mxu0 0
    %632 = vmatprep.subr.bf16.mxu0 0
    %633 = vmatpush1.bf16.msra.mxu0 0
    %634 = vmatprep.subr.bf16.mxu0 0
    %635 = vmatpush1.bf16.msra.mxu0 0
    %636 = vmatprep.subr.bf16.mxu0 0
    %637 = vmatpush1.bf16.msra.mxu0 0
    %638 = vmatprep.subr.bf16.mxu0 0
    %639 = vmatpush1.bf16.msra.mxu0 0
    %640 = vmatprep.subr.bf16.mxu0 0
    %641 = vmatpush1.bf16.msra.mxu0 0
    %642 = vmatprep.subr.bf16.mxu0 0
    %643 = vmatpush1.bf16.msra.mxu0 0
    %644 = vmatprep.subr.bf16.mxu0 0
    %645 = vmatpush1.bf16.msra.mxu0 0
    %646 = vmatprep.mubr.bf16.mxu0 0
    %647 = vmatmul.mubr.bf16.gmra.mrb[0].mxu0 %v315
    %v648 = vpop.f32.mrb[0].mxu0
    %v649 = vadd.f32 0.0, %v648
    %v650 = vpop.f32.mrb[0].mxu0
    %v651 = vadd.f32 0.0, %v650
    %v652 = vpop.f32.mrb[0].mxu0
    %v653 = vpop.f32.mrb[0].mxu0
    %654 = vdwg.mxu0
    %655 = vmatprep.subr.bf16.mxu0 %v248
    %656 = vmatpush1.bf16.msra.mxu0 %v247
    %657 = vmatprep.subr.bf16.mxu0 %v264
    %658 = vmatpush1.bf16.msra.mxu0 %v263
    %659 = vmatprep.subr.bf16.mxu0 %v366
    %660 = vmatpush1.bf16.msra.mxu0 %v363
    %661 = vmatprep.subr.bf16.mxu0 0
    %662 = vmatpush1.bf16.msra.mxu0 0
    %663 = vmatprep.subr.bf16.mxu0 0
    %664 = vmatpush1.bf16.msra.mxu0 0
    %665 = vmatprep.subr.bf16.mxu0 0
    %666 = vmatpush1.bf16.msra.mxu0 0
    %667 = vmatprep.subr.bf16.mxu0 0
    %668 = vmatpush1.bf16.msra.mxu0 0
    %669 = vmatprep.subr.bf16.mxu0 0
    %670 = vmatpush1.bf16.msra.mxu0 0
    %671 = vmatprep.subr.bf16.mxu0 0
    %672 = vmatpush1.bf16.msra.mxu0 0
    %673 = vmatprep.subr.bf16.mxu0 0
    %674 = vmatpush1.bf16.msra.mxu0 0
    %675 = vmatprep.subr.bf16.mxu0 0
    %676 = vmatpush1.bf16.msra.mxu0 0
    %677 = vmatprep.subr.bf16.mxu0 0
    %678 = vmatpush1.bf16.msra.mxu0 0
    %679 = vmatprep.subr.bf16.mxu0 0
    %680 = vmatpush1.bf16.msra.mxu0 0
    %681 = vmatprep.subr.bf16.mxu0 0
    %682 = vmatpush1.bf16.msra.mxu0 0
    %683 = vmatprep.subr.bf16.mxu0 0
    %684 = vmatpush1.bf16.msra.mxu0 0
    %685 = vmatprep.subr.bf16.mxu0 0
    %686 = vmatpush1.bf16.msra.mxu0 0
    %687 = vmatprep.mubr.bf16.mxu0 0
    %688 = vmatmul.mubr.bf16.gmra.mrb[0].mxu0 %v315
    %v689 = vpop.f32.mrb[0].mxu0
    %v690 = vadd.f32 0.0, %v689
    %v691 = vpop.f32.mrb[0].mxu0
    %v692 = vadd.f32 0.0, %v691
    %v693 = vpop.f32.mrb[0].mxu0
    %v694 = vpop.f32.mrb[0].mxu0
    %695 = vdwg.mxu0
    %v696 = vld [vmem:[#allocation5] sm:$0xff]
    %v697 = vld [vmem:[#allocation5 + $0x8] sm:$0xff]
    %v698 = vld [vmem:[#allocation5 + $0x10] sm:$0xff]
    %v699 = vld [vmem:[#allocation5 + $0x18] sm:$0xff]
    %v700 = vld [vmem:[#allocation5 + $0x20] sm:$0xff]
    %v701 = vld [vmem:[#allocation5 + $0x28] sm:$0xff]
    %v702 = vld [vmem:[#allocation5 + $0x30] sm:$0xff]
    %v703 = vld [vmem:[#allocation5 + $0x38] sm:$0xff]
    %v704 = vtanh.pop %v403
    %v705 = vtanh.pop %v405
    %v706 = vmul.f32 %v704, %v68
    %v707 = vmul.f32 %v705, %v69
    %v708 = vadd.f32 %v706, %v70
    %v709 = vadd.f32 %v707, %v71
    %711 = vrot.lane.b32.xlu0 %v709, 64
    %v712 = vpop.permute.xlu0 %711
    %v714 = vmul.f32 %v708, %v712
    %v715 = vtanh.pop %v714
    %v716 = vmul.f32 %v709, %v715
    %v717 = vpack.c.bf16 %v716, %v716
    %v726 = vunpack.c.l.b16 %v696
    %v727 = vunpack.c.h.b16 %v696
    %v728 = vunpack.c.l.b16 %v697
    %v729 = vunpack.c.h.b16 %v697
    %v730 = vunpack.c.l.b16 %v698
    %v731 = vunpack.c.h.b16 %v698
    %v732 = vunpack.c.l.b16 %v699
    %v733 = vunpack.c.h.b16 %v699
    %v734 = vunpack.c.l.b16 %v700
    %v735 = vunpack.c.h.b16 %v700
    %v736 = vunpack.c.l.b16 %v701
    %v737 = vunpack.c.h.b16 %v701
    %v738 = vunpack.c.l.b16 %v702
    %v739 = vunpack.c.h.b16 %v702
    %v740 = vunpack.c.l.b16 %v703
    %v741 = vunpack.c.h.b16 %v703
    %v742 = vpack.c.b16 %v728, %v726
    %v743 = vpack.c.b16 %v729, %v727
    %v744 = vpack.c.b16 %v732, %v730
    %v745 = vpack.c.b16 %v733, %v731
    %v746 = vpack.c.b16 %v736, %v734
    %v747 = vpack.c.b16 %v737, %v735
    %v748 = vpack.c.b16 %v740, %v738
    %v749 = vpack.c.b16 %v741, %v739
    %vm758 = vcmask 523264
    %v760 = vsel %vm758, %v717, 0
    %762 = vmatprep.subr.bf16.mxu0 %v743
    %763 = vmatpush1.bf16.msra.mxu0 %v742
    %764 = vmatprep.subr.bf16.mxu0 %v745
    %765 = vmatpush1.bf16.msra.mxu0 %v744
    %766 = vmatprep.subr.bf16.mxu0 %v747
    %767 = vmatpush1.bf16.msra.mxu0 %v746
    %768 = vmatprep.subr.bf16.mxu0 %v749
    %769 = vmatpush1.bf16.msra.mxu0 %v748
    %770 = vmatprep.subr.bf16.mxu0 0
    %771 = vmatpush1.bf16.msra.mxu0 0
    %772 = vmatprep.subr.bf16.mxu0 0
    %773 = vmatpush1.bf16.msra.mxu0 0
    %774 = vmatprep.subr.bf16.mxu0 0
    %775 = vmatpush1.bf16.msra.mxu0 0
    %776 = vmatprep.subr.bf16.mxu0 0
    %777 = vmatpush1.bf16.msra.mxu0 0
    %778 = vmatprep.subr.bf16.mxu0 0
    %779 = vmatpush1.bf16.msra.mxu0 0
    %780 = vmatprep.subr.bf16.mxu0 0
    %781 = vmatpush1.bf16.msra.mxu0 0
    %782 = vmatprep.subr.bf16.mxu0 0
    %783 = vmatpush1.bf16.msra.mxu0 0
    %784 = vmatprep.subr.bf16.mxu0 0
    %785 = vmatpush1.bf16.msra.mxu0 0
    %786 = vmatprep.subr.bf16.mxu0 0
    %787 = vmatpush1.bf16.msra.mxu0 0
    %788 = vmatprep.subr.bf16.mxu0 0
    %789 = vmatpush1.bf16.msra.mxu0 0
    %790 = vmatprep.subr.bf16.mxu0 0
    %791 = vmatpush1.bf16.msra.mxu0 0
    %792 = vmatprep.subr.bf16.mxu0 0
    %793 = vmatpush1.bf16.msra.mxu0 0
    %794 = vmatprep.mubr.bf16.mxu0 0
    %795 = vmatmul.mubr.bf16.gmra.mrb[0].mxu0 %v760
    %v796 = vpop.f32.mrb[0].mxu0
    %v797 = vadd.f32 %v444, %v796
    %v798 = vpop.f32.mrb[0].mxu0
    %v799 = vadd.f32 %v446, %v798
    %v800 = vpop.f32.mrb[0].mxu0
    %v801 = vpop.f32.mrb[0].mxu0
    %802 = vdwg.mxu0
    %v803 = vtanh.pop %v797
    %v804 = vtanh.pop %v799
    %v805 = vmul.f32 %v803, %v68
    %v806 = vmul.f32 %v804, %v69
    %v807 = vadd.f32 %v805, %v70
    %v808 = vadd.f32 %v806, %v71
    %810 = vrot.lane.b32.xlu0 %v714, 64
    %v811 = vpop.permute.xlu0 %810
    %v813 = vmul.f32 %v807, %v811
    %815 = vrot.lane.b32.xlu0 %v808, 64
    %v816 = vpop.permute.xlu0 %815
    %v818 = vmul.f32 %v807, %v816
    %820 = vrot.lane.b32.xlu0 %v818, 64
    %v821 = vpop.permute.xlu0 %820
    %v823 = vadd.f32 %v813, %v821
    %v824 = vtanh.pop %v823
    %826 = vrot.lane.b32.xlu0 %v824, 64
    %v827 = vpop.permute.xlu0 %826
    %v829 = vmul.f32 %v808, %v827
    %v830 = vpack.c.bf16 %v829, %v829
    %v832 = vsel %vm758, %v830, 0
    %834 = vmatprep.subr.bf16.mxu0 %v743
    %835 = vmatpush1.bf16.msra.mxu0 %v742
    %836 = vmatprep.subr.bf16.mxu0 %v745
    %837 = vmatpush1.bf16.msra.mxu0 %v744
    %838 = vmatprep.subr.bf16.mxu0 %v747
    %839 = vmatpush1.bf16.msra.mxu0 %v746
    %840 = vmatprep.subr.bf16.mxu0 %v749
    %841 = vmatpush1.bf16.msra.mxu0 %v748
    %842 = vmatprep.subr.bf16.mxu0 0
    %843 = vmatpush1.bf16.msra.mxu0 0
    %844 = vmatprep.subr.bf16.mxu0 0
    %845 = vmatpush1.bf16.msra.mxu0 0
    %846 = vmatprep.subr.bf16.mxu0 0
    %847 = vmatpush1.bf16.msra.mxu0 0
    %848 = vmatprep.subr.bf16.mxu0 0
    %849 = vmatpush1.bf16.msra.mxu0 0
    %850 = vmatprep.subr.bf16.mxu0 0
    %851 = vmatpush1.bf16.msra.mxu0 0
    %852 = vmatprep.subr.bf16.mxu0 0
    %853 = vmatpush1.bf16.msra.mxu0 0
    %854 = vmatprep.subr.bf16.mxu0 0
    %855 = vmatpush1.bf16.msra.mxu0 0
    %856 = vmatprep.subr.bf16.mxu0 0
    %857 = vmatpush1.bf16.msra.mxu0 0
    %858 = vmatprep.subr.bf16.mxu0 0
    %859 = vmatpush1.bf16.msra.mxu0 0
    %860 = vmatprep.subr.bf16.mxu0 0
    %861 = vmatpush1.bf16.msra.mxu0 0
    %862 = vmatprep.subr.bf16.mxu0 0
    %863 = vmatpush1.bf16.msra.mxu0 0
    %864 = vmatprep.subr.bf16.mxu0 0
    %865 = vmatpush1.bf16.msra.mxu0 0
    %866 = vmatprep.mubr.bf16.mxu0 0
    %867 = vmatmul.mubr.bf16.gmra.mrb[0].mxu0 %v832
    %v868 = vpop.f32.mrb[0].mxu0
    %v869 = vadd.f32 %v485, %v868
    %v870 = vpop.f32.mrb[0].mxu0
    %v871 = vadd.f32 %v487, %v870
    %v872 = vpop.f32.mrb[0].mxu0
    %v873 = vpop.f32.mrb[0].mxu0
    %874 = vdwg.mxu0
    %v875 = vtanh.pop %v869
    %v876 = vtanh.pop %v871
    %v877 = vmul.f32 %v875, %v68
    %v878 = vmul.f32 %v876, %v69
    %v879 = vadd.f32 %v877, %v70
    %v880 = vadd.f32 %v878, %v71
    %v881 = vmul.f32 %v879, %v823
    %883 = vrot.lane.b32.xlu0 %v880, 64
    %v884 = vpop.permute.xlu0 %883
    %v886 = vmul.f32 %v879, %v884
    %888 = vrot.lane.b32.xlu0 %v886, 64
    %v889 = vpop.permute.xlu0 %888
    %v891 = vadd.f32 %v881, %v889
    %v892 = vtanh.pop %v891
    %894 = vrot.lane.b32.xlu0 %v892, 64
    %v895 = vpop.permute.xlu0 %894
    %v897 = vmul.f32 %v880, %v895
    %v898 = vpack.c.bf16 %v897, %v897
    %v900 = vsel %vm758, %v898, 0
    %902 = vmatprep.subr.bf16.mxu0 %v743
    %903 = vmatpush1.bf16.msra.mxu0 %v742
    %904 = vmatprep.subr.bf16.mxu0 %v745
    %905 = vmatpush1.bf16.msra.mxu0 %v744
    %906 = vmatprep.subr.bf16.mxu0 %v747
    %907 = vmatpush1.bf16.msra.mxu0 %v746
    %908 = vmatprep.subr.bf16.mxu0 %v749
    %909 = vmatpush1.bf16.msra.mxu0 %v748
    %910 = vmatprep.subr.bf16.mxu0 0
    %911 = vmatpush1.bf16.msra.mxu0 0
    %912 = vmatprep.subr.bf16.mxu0 0
    %913 = vmatpush1.bf16.msra.mxu0 0
    %914 = vmatprep.subr.bf16.mxu0 0
    %915 = vmatpush1.bf16.msra.mxu0 0
    %916 = vmatprep.subr.bf16.mxu0 0
    %917 = vmatpush1.bf16.msra.mxu0 0
    %918 = vmatprep.subr.bf16.mxu0 0
    %919 = vmatpush1.bf16.msra.mxu0 0
    %920 = vmatprep.subr.bf16.mxu0 0
    %921 = vmatpush1.bf16.msra.mxu0 0
    %922 = vmatprep.subr.bf16.mxu0 0
    %923 = vmatpush1.bf16.msra.mxu0 0
    %924 = vmatprep.subr.bf16.mxu0 0
    %925 = vmatpush1.bf16.msra.mxu0 0
    %926 = vmatprep.subr.bf16.mxu0 0
    %927 = vmatpush1.bf16.msra.mxu0 0
    %928 = vmatprep.subr.bf16.mxu0 0
    %929 = vmatpush1.bf16.msra.mxu0 0
    %930 = vmatprep.subr.bf16.mxu0 0
    %931 = vmatpush1.bf16.msra.mxu0 0
    %932 = vmatprep.subr.bf16.mxu0 0
    %933 = vmatpush1.bf16.msra.mxu0 0
    %934 = vmatprep.mubr.bf16.mxu0 0
    %935 = vmatmul.mubr.bf16.gmra.mrb[0].mxu0 %v900
    %v936 = vpop.f32.mrb[0].mxu0
    %v937 = vadd.f32 %v526, %v936
    %v938 = vpop.f32.mrb[0].mxu0
    %v939 = vadd.f32 %v528, %v938
    %v940 = vpop.f32.mrb[0].mxu0
    %v941 = vpop.f32.mrb[0].mxu0
    %942 = vdwg.mxu0
    %v943 = vtanh.pop %v937
    %v944 = vtanh.pop %v939
    %v945 = vmul.f32 %v943, %v68
    %v946 = vmul.f32 %v944, %v69
    %v947 = vadd.f32 %v945, %v70
    %v948 = vadd.f32 %v946, %v71
    %v949 = vmul.f32 %v947, %v891
    %951 = vrot.lane.b32.xlu0 %v948, 64
    %v952 = vpop.permute.xlu0 %951
    %v954 = vmul.f32 %v947, %v952
    %956 = vrot.lane.b32.xlu0 %v954, 64
    %v957 = vpop.permute.xlu0 %956
    %v959 = vadd.f32 %v949, %v957
    %v960 = vtanh.pop %v959
    %962 = vrot.lane.b32.xlu0 %v960, 64
    %v963 = vpop.permute.xlu0 %962
    %v965 = vmul.f32 %v948, %v963
    %v966 = vpack.c.bf16 %v965, %v965
    %v968 = vsel %vm758, %v966, 0
    %970 = vmatprep.subr.bf16.mxu0 %v743
    %971 = vmatpush1.bf16.msra.mxu0 %v742
    %972 = vmatprep.subr.bf16.mxu0 %v745
    %973 = vmatpush1.bf16.msra.mxu0 %v744
    %974 = vmatprep.subr.bf16.mxu0 %v747
    %975 = vmatpush1.bf16.msra.mxu0 %v746
    %976 = vmatprep.subr.bf16.mxu0 %v749
    %977 = vmatpush1.bf16.msra.mxu0 %v748
    %978 = vmatprep.subr.bf16.mxu0 0
    %979 = vmatpush1.bf16.msra.mxu0 0
    %980 = vmatprep.subr.bf16.mxu0 0
    %981 = vmatpush1.bf16.msra.mxu0 0
    %982 = vmatprep.subr.bf16.mxu0 0
    %983 = vmatpush1.bf16.msra.mxu0 0
    %984 = vmatprep.subr.bf16.mxu0 0
    %985 = vmatpush1.bf16.msra.mxu0 0
    %986 = vmatprep.subr.bf16.mxu0 0
    %987 = vmatpush1.bf16.msra.mxu0 0
    %988 = vmatprep.subr.bf16.mxu0 0
    %989 = vmatpush1.bf16.msra.mxu0 0
    %990 = vmatprep.subr.bf16.mxu0 0
    %991 = vmatpush1.bf16.msra.mxu0 0
    %992 = vmatprep.subr.bf16.mxu0 0
    %993 = vmatpush1.bf16.msra.mxu0 0
    %994 = vmatprep.subr.bf16.mxu0 0
    %995 = vmatpush1.bf16.msra.mxu0 0
    %996 = vmatprep.subr.bf16.mxu0 0
    %997 = vmatpush1.bf16.msra.mxu0 0
    %998 = vmatprep.subr.bf16.mxu0 0
    %999 = vmatpush1.bf16.msra.mxu0 0
    %1000 = vmatprep.subr.bf16.mxu0 0
    %1001 = vmatpush1.bf16.msra.mxu0 0
    %1002 = vmatprep.mubr.bf16.mxu0 0
    %1003 = vmatmul.mubr.bf16.gmra.mrb[0].mxu0 %v968
    %v1004 = vpop.f32.mrb[0].mxu0
    %v1005 = vadd.f32 %v567, %v1004
    %v1006 = vpop.f32.mrb[0].mxu0
    %v1007 = vadd.f32 %v569, %v1006
    %v1008 = vpop.f32.mrb[0].mxu0
    %v1009 = vpop.f32.mrb[0].mxu0
    %1010 = vdwg.mxu0
    %v1011 = vtanh.pop %v1005
    %v1012 = vtanh.pop %v1007
    %v1013 = vmul.f32 %v1011, %v68
    %v1014 = vmul.f32 %v1012, %v69
    %v1015 = vadd.f32 %v1013, %v70
    %v1016 = vadd.f32 %v1014, %v71
    %v1017 = vmul.f32 %v1015, %v959
    %1019 = vrot.lane.b32.xlu0 %v1016, 64
    %v1020 = vpop.permute.xlu0 %1019
    %v1022 = vmul.f32 %v1015, %v1020
    %1024 = vrot.lane.b32.xlu0 %v1022, 64
    %v1025 = vpop.permute.xlu0 %1024
    %v1027 = vadd.f32 %v1017, %v1025
    %v1028 = vtanh.pop %v1027
    %1030 = vrot.lane.b32.xlu0 %v1028, 64
    %v1031 = vpop.permute.xlu0 %1030
    %v1033 = vmul.f32 %v1016, %v1031
    %v1034 = vpack.c.bf16 %v1033, %v1033
    %v1036 = vsel %vm758, %v1034, 0
    %1038 = vmatprep.subr.bf16.mxu0 %v743
    %1039 = vmatpush1.bf16.msra.mxu0 %v742
    %1040 = vmatprep.subr.bf16.mxu0 %v745
    %1041 = vmatpush1.bf16.msra.mxu0 %v744
    %1042 = vmatprep.subr.bf16.mxu0 %v747
    %1043 = vmatpush1.bf16.msra.mxu0 %v746
    %1044 = vmatprep.subr.bf16.mxu0 %v749
    %1045 = vmatpush1.bf16.msra.mxu0 %v748
    %1046 = vmatprep.subr.bf16.mxu0 0
    %1047 = vmatpush1.bf16.msra.mxu0 0
    %1048 = vmatprep.subr.bf16.mxu0 0
    %1049 = vmatpush1.bf16.msra.mxu0 0
    %1050 = vmatprep.subr.bf16.mxu0 0
    %1051 = vmatpush1.bf16.msra.mxu0 0
    %1052 = vmatprep.subr.bf16.mxu0 0
    %1053 = vmatpush1.bf16.msra.mxu0 0
    %1054 = vmatprep.subr.bf16.mxu0 0
    %1055 = vmatpush1.bf16.msra.mxu0 0
    %1056 = vmatprep.subr.bf16.mxu0 0
    %1057 = vmatpush1.bf16.msra.mxu0 0
    %1058 = vmatprep.subr.bf16.mxu0 0
    %1059 = vmatpush1.bf16.msra.mxu0 0
    %1060 = vmatprep.subr.bf16.mxu0 0
    %1061 = vmatpush1.bf16.msra.mxu0 0
    %1062 = vmatprep.subr.bf16.mxu0 0
    %1063 = vmatpush1.bf16.msra.mxu0 0
    %1064 = vmatprep.subr.bf16.mxu0 0
    %1065 = vmatpush1.bf16.msra.mxu0 0
    %1066 = vmatprep.subr.bf16.mxu0 0
    %1067 = vmatpush1.bf16.msra.mxu0 0
    %1068 = vmatprep.subr.bf16.mxu0 0
    %1069 = vmatpush1.bf16.msra.mxu0 0
    %1070 = vmatprep.mubr.bf16.mxu0 0
    %1071 = vmatmul.mubr.bf16.gmra.mrb[0].mxu0 %v1036
    %v1072 = vpop.f32.mrb[0].mxu0
    %v1073 = vadd.f32 %v608, %v1072
    %v1074 = vpop.f32.mrb[0].mxu0
    %v1075 = vadd.f32 %v610, %v1074
    %v1076 = vpop.f32.mrb[0].mxu0
    %v1077 = vpop.f32.mrb[0].mxu0
    %1078 = vdwg.mxu0
    %v1079 = vtanh.pop %v1073
    %v1080 = vtanh.pop %v1075
    %v1081 = vmul.f32 %v1079, %v68
    %v1082 = vmul.f32 %v1080, %v69
    %v1083 = vadd.f32 %v1081, %v70
    %v1084 = vadd.f32 %v1082, %v71
    %v1085 = vmul.f32 %v1083, %v1027
    %1087 = vrot.lane.b32.xlu0 %v1084, 64
    %v1088 = vpop.permute.xlu0 %1087
    %v1090 = vmul.f32 %v1083, %v1088
    %1092 = vrot.lane.b32.xlu0 %v1090, 64
    %v1093 = vpop.permute.xlu0 %1092
    %v1095 = vadd.f32 %v1085, %v1093
    %v1096 = vtanh.pop %v1095
    %1098 = vrot.lane.b32.xlu0 %v1096, 64
    %v1099 = vpop.permute.xlu0 %1098
    %v1101 = vmul.f32 %v1084, %v1099
    %v1102 = vpack.c.bf16 %v1101, %v1101
    %v1104 = vsel %vm758, %v1102, 0
    %1106 = vmatprep.subr.bf16.mxu0 %v743
    %1107 = vmatpush1.bf16.msra.mxu0 %v742
    %1108 = vmatprep.subr.bf16.mxu0 %v745
    %1109 = vmatpush1.bf16.msra.mxu0 %v744
    %1110 = vmatprep.subr.bf16.mxu0 %v747
    %1111 = vmatpush1.bf16.msra.mxu0 %v746
    %1112 = vmatprep.subr.bf16.mxu0 %v749
    %1113 = vmatpush1.bf16.msra.mxu0 %v748
    %1114 = vmatprep.subr.bf16.mxu0 0
    %1115 = vmatpush1.bf16.msra.mxu0 0
    %1116 = vmatprep.subr.bf16.mxu0 0
    %1117 = vmatpush1.bf16.msra.mxu0 0
    %1118 = vmatprep.subr.bf16.mxu0 0
    %1119 = vmatpush1.bf16.msra.mxu0 0
    %1120 = vmatprep.subr.bf16.mxu0 0
    %1121 = vmatpush1.bf16.msra.mxu0 0
    %1122 = vmatprep.subr.bf16.mxu0 0
    %1123 = vmatpush1.bf16.msra.mxu0 0
    %1124 = vmatprep.subr.bf16.mxu0 0
    %1125 = vmatpush1.bf16.msra.mxu0 0
    %1126 = vmatprep.subr.bf16.mxu0 0
    %1127 = vmatpush1.bf16.msra.mxu0 0
    %1128 = vmatprep.subr.bf16.mxu0 0
    %1129 = vmatpush1.bf16.msra.mxu0 0
    %1130 = vmatprep.subr.bf16.mxu0 0
    %1131 = vmatpush1.bf16.msra.mxu0 0
    %1132 = vmatprep.subr.bf16.mxu0 0
    %1133 = vmatpush1.bf16.msra.mxu0 0
    %1134 = vmatprep.subr.bf16.mxu0 0
    %1135 = vmatpush1.bf16.msra.mxu0 0
    %1136 = vmatprep.subr.bf16.mxu0 0
    %1137 = vmatpush1.bf16.msra.mxu0 0
    %1138 = vmatprep.mubr.bf16.mxu0 0
    %1139 = vmatmul.mubr.bf16.gmra.mrb[0].mxu0 %v1104
    %v1140 = vpop.f32.mrb[0].mxu0
    %v1141 = vadd.f32 %v649, %v1140
    %v1142 = vpop.f32.mrb[0].mxu0
    %v1143 = vadd.f32 %v651, %v1142
    %v1144 = vpop.f32.mrb[0].mxu0
    %v1145 = vpop.f32.mrb[0].mxu0
    %1146 = vdwg.mxu0
    %v1147 = vtanh.pop %v1141
    %v1148 = vtanh.pop %v1143
    %v1149 = vmul.f32 %v1147, %v68
    %v1150 = vmul.f32 %v1148, %v69
    %v1151 = vadd.f32 %v1149, %v70
    %v1152 = vadd.f32 %v1150, %v71
    %v1153 = vmul.f32 %v1151, %v1095
    %1155 = vrot.lane.b32.xlu0 %v1152, 64
    %v1156 = vpop.permute.xlu0 %1155
    %v1158 = vmul.f32 %v1151, %v1156
    %1160 = vrot.lane.b32.xlu0 %v1158, 64
    %v1161 = vpop.permute.xlu0 %1160
    %v1163 = vadd.f32 %v1153, %v1161
    %v1164 = vtanh.pop %v1163
    %1166 = vrot.lane.b32.xlu0 %v1164, 64
    %v1167 = vpop.permute.xlu0 %1166
    %v1169 = vmul.f32 %v1152, %v1167
    %v1170 = vpack.c.bf16 %v1169, %v1169
    %v1172 = vsel %vm758, %v1170, 0
    %1174 = vmatprep.subr.bf16.mxu0 %v743
    %1175 = vmatpush1.bf16.msra.mxu0 %v742
    %1176 = vmatprep.subr.bf16.mxu0 %v745
    %1177 = vmatpush1.bf16.msra.mxu0 %v744
    %1178 = vmatprep.subr.bf16.mxu0 %v747
    %1179 = vmatpush1.bf16.msra.mxu0 %v746
    %1180 = vmatprep.subr.bf16.mxu0 %v749
    %1181 = vmatpush1.bf16.msra.mxu0 %v748
    %1182 = vmatprep.subr.bf16.mxu0 0
    %1183 = vmatpush1.bf16.msra.mxu0 0
    %1184 = vmatprep.subr.bf16.mxu0 0
    %1185 = vmatpush1.bf16.msra.mxu0 0
    %1186 = vmatprep.subr.bf16.mxu0 0
    %1187 = vmatpush1.bf16.msra.mxu0 0
    %1188 = vmatprep.subr.bf16.mxu0 0
    %1189 = vmatpush1.bf16.msra.mxu0 0
    %1190 = vmatprep.subr.bf16.mxu0 0
    %1191 = vmatpush1.bf16.msra.mxu0 0
    %1192 = vmatprep.subr.bf16.mxu0 0
    %1193 = vmatpush1.bf16.msra.mxu0 0
    %1194 = vmatprep.subr.bf16.mxu0 0
    %1195 = vmatpush1.bf16.msra.mxu0 0
    %1196 = vmatprep.subr.bf16.mxu0 0
    %1197 = vmatpush1.bf16.msra.mxu0 0
    %1198 = vmatprep.subr.bf16.mxu0 0
    %1199 = vmatpush1.bf16.msra.mxu0 0
    %1200 = vmatprep.subr.bf16.mxu0 0
    %1201 = vmatpush1.bf16.msra.mxu0 0
    %1202 = vmatprep.subr.bf16.mxu0 0
    %1203 = vmatpush1.bf16.msra.mxu0 0
    %1204 = vmatprep.subr.bf16.mxu0 0
    %1205 = vmatpush1.bf16.msra.mxu0 0
    %1206 = vmatprep.mubr.bf16.mxu0 0
    %1207 = vmatmul.mubr.bf16.gmra.mrb[0].mxu0 %v1172
    %v1208 = vpop.f32.mrb[0].mxu0
    %v1209 = vadd.f32 %v690, %v1208
    %v1210 = vpop.f32.mrb[0].mxu0
    %v1211 = vadd.f32 %v692, %v1210
    %v1212 = vpop.f32.mrb[0].mxu0
    %v1213 = vpop.f32.mrb[0].mxu0
    %1214 = vdwg.mxu0
    %v1215 = vtanh.pop %v1209
    %v1216 = vtanh.pop %v1211
    %v1217 = vmul.f32 %v1215, %v68
    %v1218 = vmul.f32 %v1216, %v69
    %v1219 = vadd.f32 %v1217, %v70
    %v1220 = vadd.f32 %v1218, %v71
    %v1221 = vmul.f32 %v1219, %v1163
    %1223 = vrot.lane.b32.xlu0 %v1220, 64
    %v1224 = vpop.permute.xlu0 %1223
    %v1226 = vmul.f32 %v1219, %v1224
    %1228 = vrot.lane.b32.xlu0 %v1226, 64
    %v1229 = vpop.permute.xlu0 %1228
    %v1231 = vadd.f32 %v1221, %v1229
    %v1232 = vtanh.pop %v1231
    %1234 = vrot.lane.b32.xlu0 %v1232, 64
    %v1235 = vpop.permute.xlu0 %1234
    %v1237 = vmul.f32 %v1220, %v1235
    %v1238 = vmax.f32 %v1237, 0.0
    %vm1239 = vcmask 517120
    %v1240 = vsel %vm1239, %v1238, 0.0
    %1241 = vadd.xlane.f32.xlu0 %v1240
    %v1242 = vpop.xlane.xlu0 %1241
    %v1243 = vrcp.pop 64.0
    %v1244 = vmul.f32 %v1242, %v1243
    %v1245 = vsub.f32 %v1238, %v1244
    %v1246 = vmul.f32 %v1245, %v1245
    %v1247 = vsel %vm1239, %v1246, 0.0
    %1248 = vadd.xlane.f32.xlu0 %v1247
    %v1249 = vpop.xlane.xlu0 %1248
    %v1250 = vmul.f32 %v1249, %v1243
    %v1251 = vadd.f32 %v1250, 1e-05
    %v1252 = vrsqrt.pop %v1251
    %v1253 = vmul.f32 %v1245, %v1252
    %v1254 = vld [vmem:[%s4] sm:$0x1]
    %v1256 = vlaneseq
    %v1257 = vshrl.u32 %v1256, 7
    %v1258 = vsub.s32 0, %v1257
    %v1259 = vrot.slane %v1254, %v1258
    %v1261 = vmul.f32 %v1253, %v1259
    %1262 = vrot.lane.b32.xlu0 %v1259, 64
    %v1263 = vpop.permute.xlu0 %1262
    %v1265 = vadd.f32 %v1261, %v1263
    %v1266 = vpack.c.bf16 %v1265, %v1265
    %v1267 = vld [vmem:[#allocation7 + $0x4] sm:$0xf]
    %v1268 = vld [vmem:[#allocation7 + $0x10] sm:$0xf]
    %v1269 = vld [vmem:[#allocation7 + $0x1c] sm:$0xf]
    %v1270 = vld [vmem:[#allocation7 + $0x28] sm:$0xf]
    %v1271 = vld [vmem:[#allocation7 + $0x34] sm:$0xf]
    %v1272 = vld [vmem:[#allocation7 + $0x40] sm:$0xf]
    %v1273 = vld [vmem:[#allocation7 + $0x4c] sm:$0xf]
    %v1274 = vld [vmem:[#allocation7 + $0x58] sm:$0xf]
    %v1283 = vunpack.c.l.b16 %v1267
    %v1284 = vunpack.c.l.b16 %v1268
    %v1285 = vunpack.c.l.b16 %v1269
    %v1286 = vunpack.c.l.b16 %v1270
    %v1287 = vunpack.c.l.b16 %v1271
    %v1288 = vunpack.c.l.b16 %v1272
    %v1289 = vunpack.c.l.b16 %v1273
    %v1290 = vunpack.c.l.b16 %v1274
    %v1291 = vpack.c.b16 %v1284, %v1283
    %v1292 = vpack.c.b16 %v1286, %v1285
    %v1293 = vpack.c.b16 %v1288, %v1287
    %v1294 = vpack.c.b16 %v1290, %v1289
    %v1300 = vsel %vm758, %v1266, 0
    %1302 = vmatprep.subr.bf16.mxu0 0
    %1303 = vmatpush1.bf16.msra.mxu0 %v1291
    %1304 = vmatprep.subr.bf16.mxu0 0
    %1305 = vmatpush1.bf16.msra.mxu0 %v1292
    %1306 = vmatprep.subr.bf16.mxu0 0
    %1307 = vmatpush1.bf16.msra.mxu0 %v1293
    %1308 = vmatprep.subr.bf16.mxu0 0
    %1309 = vmatpush1.bf16.msra.mxu0 %v1294
    %1310 = vmatprep.subr.bf16.mxu0 0
    %1311 = vmatpush1.bf16.msra.mxu0 0
    %1312 = vmatprep.subr.bf16.mxu0 0
    %1313 = vmatpush1.bf16.msra.mxu0 0
    %1314 = vmatprep.subr.bf16.mxu0 0
    %1315 = vmatpush1.bf16.msra.mxu0 0
    %1316 = vmatprep.subr.bf16.mxu0 0
    %1317 = vmatpush1.bf16.msra.mxu0 0
    %1318 = vmatprep.subr.bf16.mxu0 0
    %1319 = vmatpush1.bf16.msra.mxu0 0
    %1320 = vmatprep.subr.bf16.mxu0 0
    %1321 = vmatpush1.bf16.msra.mxu0 0
    %1322 = vmatprep.subr.bf16.mxu0 0
    %1323 = vmatpush1.bf16.msra.mxu0 0
    %1324 = vmatprep.subr.bf16.mxu0 0
    %1325 = vmatpush1.bf16.msra.mxu0 0
    %1326 = vmatprep.subr.bf16.mxu0 0
    %1327 = vmatpush1.bf16.msra.mxu0 0
    %1328 = vmatprep.subr.bf16.mxu0 0
    %1329 = vmatpush1.bf16.msra.mxu0 0
    %1330 = vmatprep.subr.bf16.mxu0 0
    %1331 = vmatpush1.bf16.msra.mxu0 0
    %1332 = vmatprep.subr.bf16.mxu0 0
    %1333 = vmatpush1.bf16.msra.mxu0 0
    %1334 = vmatprep.mubr.bf16.mxu0 0
    %1335 = vmatmul.mubr.bf16.gmra.mrb[0].mxu0 %v1300
    %v1336 = vpop.f32.mrb[0].mxu0
    %v1337 = vadd.f32 0.0, %v1336
    %v1338 = vpop.f32.mrb[0].mxu0
    %v1339 = vpop.f32.mrb[0].mxu0
    %v1340 = vpop.f32.mrb[0].mxu0
    %1341 = vdwg.mxu0
    %1343 = vrot.lane.b32.xlu0 %v1337, 64
    %v1344 = vpop.permute.xlu0 %1343
    %v1346 = vmax.f32 %v1337, %v1344
    %v1347 = vld [vmem:[%s4 + $0x2] sm:$0x1]
    %v1349 = vlaneseq
    %v1350 = vshrl.u32 %v1349, 7
    %v1351 = vsub.s32 0, %v1350
    %v1352 = vrot.slane %v1347, %v1351
    %1353 = vrot.lane.b32.xlu0 %v1352, 64
    %v1354 = vpop.permute.xlu0 %1353
    %v1356 = vadd.f32 %v1346, %v1354
    %v1357 = vmax.f32 %v1356, 0.0
    %v1358 = vld [vmem:[#allocation7] sm:$0xf]
    %v1359 = vld [vmem:[#allocation7 + $0xc] sm:$0xf]
    %v1360 = vld [vmem:[#allocation7 + $0x18] sm:$0xf]
    %v1361 = vld [vmem:[#allocation7 + $0x24] sm:$0xf]
    %v1362 = vld [vmem:[#allocation7 + $0x30] sm:$0xf]
    %v1363 = vld [vmem:[#allocation7 + $0x3c] sm:$0xf]
    %v1364 = vld [vmem:[#allocation7 + $0x48] sm:$0xf]
    %v1365 = vld [vmem:[#allocation7 + $0x54] sm:$0xf]
    %v1366 = vpack.c.bf16 %v1357, %v1357
    %v1375 = vunpack.c.l.b16 %v1358
    %v1376 = vunpack.c.l.b16 %v1359
    %v1377 = vunpack.c.l.b16 %v1360
    %v1378 = vunpack.c.l.b16 %v1361
    %v1379 = vunpack.c.l.b16 %v1362
    %v1380 = vunpack.c.l.b16 %v1363
    %v1381 = vunpack.c.l.b16 %v1364
    %v1382 = vunpack.c.l.b16 %v1365
    %v1383 = vpack.c.b16 %v1376, %v1375
    %v1384 = vpack.c.b16 %v1378, %v1377
    %v1385 = vpack.c.b16 %v1380, %v1379
    %v1386 = vpack.c.b16 %v1382, %v1381
    %1387 = vrot.lane.b32.xlu0 %v1383, 64
    %v1388 = vpop.permute.xlu0 %1387
    %1389 = vrot.lane.b32.xlu0 %v1384, 64
    %v1390 = vpop.permute.xlu0 %1389
    %1391 = vrot.lane.b32.xlu0 %v1385, 64
    %v1392 = vpop.permute.xlu0 %1391
    %1393 = vrot.lane.b32.xlu0 %v1386, 64
    %v1394 = vpop.permute.xlu0 %1393
    %v1400 = vsel %vm758, %v1366, 0
    %1402 = vmatprep.subr.bf16.mxu0 0
    %1403 = vmatpush1.bf16.msra.mxu0 %v1388
    %1404 = vmatprep.subr.bf16.mxu0 0
    %1405 = vmatpush1.bf16.msra.mxu0 %v1390
    %1406 = vmatprep.subr.bf16.mxu0 0
    %1407 = vmatpush1.bf16.msra.mxu0 %v1392
    %1408 = vmatprep.subr.bf16.mxu0 0
    %1409 = vmatpush1.bf16.msra.mxu0 %v1394
    %1410 = vmatprep.subr.bf16.mxu0 0
    %1411 = vmatpush1.bf16.msra.mxu0 0
    %1412 = vmatprep.subr.bf16.mxu0 0
    %1413 = vmatpush1.bf16.msra.mxu0 0
    %1414 = vmatprep.subr.bf16.mxu0 0
    %1415 = vmatpush1.bf16.msra.mxu0 0
    %1416 = vmatprep.subr.bf16.mxu0 0
    %1417 = vmatpush1.bf16.msra.mxu0 0
    %1418 = vmatprep.subr.bf16.mxu0 0
    %1419 = vmatpush1.bf16.msra.mxu0 0
    %1420 = vmatprep.subr.bf16.mxu0 0
    %1421 = vmatpush1.bf16.msra.mxu0 0
    %1422 = vmatprep.subr.bf16.mxu0 0
    %1423 = vmatpush1.bf16.msra.mxu0 0
    %1424 = vmatprep.subr.bf16.mxu0 0
    %1425 = vmatpush1.bf16.msra.mxu0 0
    %1426 = vmatprep.subr.bf16.mxu0 0
    %1427 = vmatpush1.bf16.msra.mxu0 0
    %1428 = vmatprep.subr.bf16.mxu0 0
    %1429 = vmatpush1.bf16.msra.mxu0 0
    %1430 = vmatprep.subr.bf16.mxu0 0
    %1431 = vmatpush1.bf16.msra.mxu0 0
    %1432 = vmatprep.subr.bf16.mxu0 0
    %1433 = vmatpush1.bf16.msra.mxu0 0
    %1434 = vmatprep.mubr.bf16.mxu0 0
    %1435 = vmatmul.mubr.bf16.gmra.mrb[0].mxu0 %v1400
    %v1436 = vpop.f32.mrb[0].mxu0
    %v1437 = vadd.f32 0.0, %v1436
    %v1438 = vpop.f32.mrb[0].mxu0
    %v1439 = vpop.f32.mrb[0].mxu0
    %v1440 = vpop.f32.mrb[0].mxu0
    %1441 = vdwg.mxu0
    %1446 = vmatprep.subr.bf16.mxu0 0
    %1447 = vmatpush1.bf16.msra.mxu0 %v1383
    %1448 = vmatprep.subr.bf16.mxu0 0
    %1449 = vmatpush1.bf16.msra.mxu0 %v1384
    %1450 = vmatprep.subr.bf16.mxu0 0
    %1451 = vmatpush1.bf16.msra.mxu0 %v1385
    %1452 = vmatprep.subr.bf16.mxu0 0
    %1453 = vmatpush1.bf16.msra.mxu0 %v1386
    %1454 = vmatprep.subr.bf16.mxu0 0
    %1455 = vmatpush1.bf16.msra.mxu0 0
    %1456 = vmatprep.subr.bf16.mxu0 0
    %1457 = vmatpush1.bf16.msra.mxu0 0
    %1458 = vmatprep.subr.bf16.mxu0 0
    %1459 = vmatpush1.bf16.msra.mxu0 0
    %1460 = vmatprep.subr.bf16.mxu0 0
    %1461 = vmatpush1.bf16.msra.mxu0 0
    %1462 = vmatprep.subr.bf16.mxu0 0
    %1463 = vmatpush1.bf16.msra.mxu0 0
    %1464 = vmatprep.subr.bf16.mxu0 0
    %1465 = vmatpush1.bf16.msra.mxu0 0
    %1466 = vmatprep.subr.bf16.mxu0 0
    %1467 = vmatpush1.bf16.msra.mxu0 0
    %1468 = vmatprep.subr.bf16.mxu0 0
    %1469 = vmatpush1.bf16.msra.mxu0 0
    %1470 = vmatprep.subr.bf16.mxu0 0
    %1471 = vmatpush1.bf16.msra.mxu0 0
    %1472 = vmatprep.subr.bf16.mxu0 0
    %1473 = vmatpush1.bf16.msra.mxu0 0
    %1474 = vmatprep.subr.bf16.mxu0 0
    %1475 = vmatpush1.bf16.msra.mxu0 0
    %1476 = vmatprep.subr.bf16.mxu0 0
    %1477 = vmatpush1.bf16.msra.mxu0 0
    %1478 = vmatprep.mubr.bf16.mxu0 0
    %1479 = vmatmul.mubr.bf16.gmra.mrb[0].mxu0 %v1300
    %v1480 = vpop.f32.mrb[0].mxu0
    %v1481 = vadd.f32 %v1437, %v1480
    %v1482 = vpop.f32.mrb[0].mxu0
    %v1483 = vpop.f32.mrb[0].mxu0
    %v1484 = vpop.f32.mrb[0].mxu0
    %1485 = vdwg.mxu0
    %v1486 = vld [vmem:[%s4 + $0x1] sm:$0x1]
    %v1488 = vlaneseq
    %v1489 = vshrl.u32 %v1488, 7
    %v1490 = vsub.s32 0, %v1489
    %v1491 = vrot.slane %v1486, %v1490
    %v1493 = vadd.f32 %v1481, %v1491
    %v1494 = vmax.f32 %v1493, 0.0
    %v1495 = vsel %vm1239, %v1494, 0.0
    %1496 = vadd.xlane.f32.xlu0 %v1495
    %v1497 = vpop.xlane.xlu0 %1496
    %v1498 = vmul.f32 %v1497, %v1243
    %v1499 = vsub.f32 %v1494, %v1498
    %v1500 = vmul.f32 %v1499, %v1499
    %v1501 = vsel %vm1239, %v1500, 0.0
    %1502 = vadd.xlane.f32.xlu0 %v1501
    %v1503 = vpop.xlane.xlu0 %1502
    %v1504 = vmul.f32 %v1503, %v1243
    %v1505 = vadd.f32 %v1504, 1e-05
    %v1506 = vrsqrt.pop %v1505
    %v1507 = vmul.f32 %v1499, %v1506
    %1508 = vrot.lane.b32.xlu0 %v1491, 64
    %v1509 = vpop.permute.xlu0 %1508
    %v1511 = vmul.f32 %v1507, %v1509
    %v1513 = vadd.f32 %v1511, %v1352
    %v1514 = vpack.c.bf16 %v1513, %v1513
    %v1515 = vld [vmem:[#allocation7 + $0x8] sm:$0xf]
    %v1516 = vld [vmem:[#allocation7 + $0x14] sm:$0xf]
    %v1517 = vld [vmem:[#allocation7 + $0x20] sm:$0xf]
    %v1518 = vld [vmem:[#allocation7 + $0x2c] sm:$0xf]
    %v1519 = vld [vmem:[#allocation7 + $0x38] sm:$0xf]
    %v1520 = vld [vmem:[#allocation7 + $0x44] sm:$0xf]
    %v1521 = vld [vmem:[#allocation7 + $0x50] sm:$0xf]
    %v1522 = vld [vmem:[#allocation7 + $0x5c] sm:$0xf]
    %v1523 = vld [vmem:[%s4 + $0x3] sm:$0x1]
    %v1525 = vlaneseq
    %v1526 = vshrl.u32 %v1525, 7
    %v1527 = vsub.s32 0, %v1526
    %v1528 = vrot.slane %v1523, %v1527
    %v1538 = vunpack.c.l.b16 %v1515
    %v1539 = vunpack.c.l.b16 %v1516
    %v1540 = vunpack.c.l.b16 %v1517
    %v1541 = vunpack.c.l.b16 %v1518
    %v1542 = vunpack.c.l.b16 %v1519
    %v1543 = vunpack.c.l.b16 %v1520
    %v1544 = vunpack.c.l.b16 %v1521
    %v1545 = vunpack.c.l.b16 %v1522
    %v1546 = vpack.c.b16 %v1539, %v1538
    %v1547 = vpack.c.b16 %v1541, %v1540
    %v1548 = vpack.c.b16 %v1543, %v1542
    %v1549 = vpack.c.b16 %v1545, %v1544
    %v1555 = vsel %vm758, %v1514, 0
    %1557 = vmatprep.subr.bf16.mxu0 0
    %1558 = vmatpush1.bf16.msra.mxu0 %v1546
    %1559 = vmatprep.subr.bf16.mxu0 0
    %1560 = vmatpush1.bf16.msra.mxu0 %v1547
    %1561 = vmatprep.subr.bf16.mxu0 0
    %1562 = vmatpush1.bf16.msra.mxu0 %v1548
    %1563 = vmatprep.subr.bf16.mxu0 0
    %1564 = vmatpush1.bf16.msra.mxu0 %v1549
    %1565 = vmatprep.subr.bf16.mxu0 0
    %1566 = vmatpush1.bf16.msra.mxu0 0
    %1567 = vmatprep.subr.bf16.mxu0 0
    %1568 = vmatpush1.bf16.msra.mxu0 0
    %1569 = vmatprep.subr.bf16.mxu0 0
    %1570 = vmatpush1.bf16.msra.mxu0 0
    %1571 = vmatprep.subr.bf16.mxu0 0
    %1572 = vmatpush1.bf16.msra.mxu0 0
    %1573 = vmatprep.subr.bf16.mxu0 0
    %1574 = vmatpush1.bf16.msra.mxu0 0
    %1575 = vmatprep.subr.bf16.mxu0 0
    %1576 = vmatpush1.bf16.msra.mxu0 0
    %1577 = vmatprep.subr.bf16.mxu0 0
    %1578 = vmatpush1.bf16.msra.mxu0 0
    %1579 = vmatprep.subr.bf16.mxu0 0
    %1580 = vmatpush1.bf16.msra.mxu0 0
    %1581 = vmatprep.subr.bf16.mxu0 0
    %1582 = vmatpush1.bf16.msra.mxu0 0
    %1583 = vmatprep.subr.bf16.mxu0 0
    %1584 = vmatpush1.bf16.msra.mxu0 0
    %1585 = vmatprep.subr.bf16.mxu0 0
    %1586 = vmatpush1.bf16.msra.mxu0 0
    %1587 = vmatprep.subr.bf16.mxu0 0
    %1588 = vmatpush1.bf16.msra.mxu0 0
    %1589 = vmatprep.mubr.bf16.mxu0 0
    %1590 = vmatmul.mubr.bf16.gmra.mrb[0].mxu0 %v1555
    %v1591 = vpop.f32.mrb[0].mxu0
    %v1592 = vadd.f32 %v1528, %v1591
    %v1593 = vpop.f32.mrb[0].mxu0
    %v1594 = vpop.f32.mrb[0].mxu0
    %v1595 = vpop.f32.mrb[0].mxu0
    %1596 = vdwg.mxu0
    %vm1597 = vcmask 17408
    %1598 = vst.msk [vmem:[#allocation8] sm:$0x3] %vm1597, %v1592
    // Predicated region
    $region34: #{lstm_cnn_forward.1} parent=1 // pred_check
      _
    $region35: #{lstm_cnn_forward.1} parent=1 // pred_check_branch
      %1600 = sbr.rel (0) target = $region37
    $region36: #{lstm_cnn_forward.1} parent=1 // pred_region
      %s1602 = ssub.s32 32, 32
      %1603 = vsyncadd [#allocation4], %s1602
      %s1605 = sshll.u32 [#allocation8], 4
      %s1606 = int_to_ptr.vmem [resolvable:$true] %s1605
      %1608 = dma.vmem_to_hbm [thread:$0]  %s1606, 32, %s5, [#allocation4]
    $region37: #{lstm_cnn_forward.1} parent=1 // pred_fallthru
      _
    // Predicated region
    $region38: #{lstm_cnn_forward.1} parent=1 // pred_check
      _
    $region39: #{lstm_cnn_forward.1} parent=1 // pred_check_branch
      %1610 = sbr.rel (0) target = $region41
    $region40: #{lstm_cnn_forward.1} parent=1 // pred_region
      %1611 = dma.done [#allocation4], 32
    $region41: #{lstm_cnn_forward.1} parent=1 // pred_fallthru
      _
    %1612 = vsyncpa [#allocation3], 1
    %1613 = vsyncpa [#allocation6], 1
    %1614 = vsyncpa [#allocation4], 1

</llo_original>
